<compile_context>
chip_gen: v7x
topology: tpu7x:2x2x1
jax: 0.10.0
libtpu: 0.0.40
codegen_flags: <defaults>
</compile_context>

<pallas_src>
import functools
import warnings

import jax
import jax.numpy as jnp
from jax import lax
from jax.experimental import pallas as pl
from jax.experimental.pallas import tpu as pltpu

LN_EPS = 1e-5   # torch.nn.LayerNorm default


def _round_up(a: int, b: int) -> int:
    return (a + b - 1) // b * b


@functools.lru_cache(maxsize=None)
def _vmem_sizes():
    """(pipeline working-set budget, scoped VMEM limit) for this TPU generation."""
    try:
        cap = int(pltpu.get_tpu_info().vmem_capacity_bytes)
    except Exception:
        cap = 64 * 1024 * 1024          # conservative (v7x-sized) fallback
    return int(cap * 0.6), int(cap * 0.75)


def _dense_residual_kernel(x_ref, params_ref, b1_ref, w1_ref, w2_ref, o_ref):
    """out = x + gamma * Linear2(relu(Linear1(LayerNorm(x)))) for one row tile."""
    x = x_ref[...].astype(jnp.float32)                    # (tm, N)
    n = x.shape[-1]

    params = params_ref[...]                              # (8, N) f32
    ln_w, ln_b = params[0:1, :], params[1:2, :]
    b2, gamma = params[2:3, :], params[3:4, :]

    # --- LayerNorm over the (unpadded) feature axis ---
    inv_n = jnp.float32(1.0 / n)
    mean = jnp.sum(x, axis=-1, keepdims=True) * inv_n
    centered = x - mean
    var = jnp.sum(centered * centered, axis=-1, keepdims=True) * inv_n
    normed = centered * lax.rsqrt(var + LN_EPS) * ln_w + ln_b

    # --- branch MLP on the MXU (weight dtype inputs, f32 accumulation) ---
    h = jnp.dot(normed.astype(w1_ref.dtype), w1_ref[...],
                preferred_element_type=jnp.float32) + b1_ref[...]    # (tm, H)
    h = jnp.maximum(h, 0.0)
    branch = jnp.dot(h.astype(w2_ref.dtype), w2_ref[...],
                     preferred_element_type=jnp.float32) + b2        # (tm, N)

    # --- scale by gamma, residual add ---
    o_ref[...] = (x + branch * gamma).astype(o_ref.dtype)


def prepare_dense_residual_params(ln_w, ln_b, w1_t, b1, w2_t, b2, gamma, *,
                                  weight_dtype=jnp.bfloat16):
    """One-time packing / cast of the layer parameters.

    Call once per parameter set and reuse the result across forward calls so
    the weight cast does not become a per-call HBM pass.
      w1_t: (N, H) = W1.T,  w2_t: (H, N) = W2.T  (pre-transposed weights).
    Use weight_dtype=jnp.float32 when exact f32 matmul parity matters.
    """
    n = ln_w.shape[-1]
    h = b1.shape[-1]
    assert w1_t.shape == (n, h) and w2_t.shape == (h, n)
    params = jnp.stack([ln_w, ln_b, b2, gamma]).astype(jnp.float32)   # (4, N)
    params = jnp.pad(params, ((0, 4), (0, 0)))                        # (8, N)
    b1_row = b1.astype(jnp.float32).reshape(1, h)
    return params, b1_row, w1_t.astype(weight_dtype), w2_t.astype(weight_dtype)


@functools.partial(jax.jit, static_argnames=("tm",))
def dense_residual_apply(x, params, b1_row, w1, w2, *, tm=1024):
    """x: (..., N); remaining args come from prepare_dense_residual_params()."""
    orig_shape = x.shape
    n = orig_shape[-1]
    h = b1_row.shape[-1]

    x2 = x.reshape(-1, n)
    rows = x2.shape[0]

    budget, vmem_limit = _vmem_sizes()
    x_bytes = jnp.dtype(x.dtype).itemsize
    w_bytes = jnp.dtype(w1.dtype).itemsize
    # Per-row bytes: x/out tiles double-buffered + f32 temporaries (x, normed,
    # branch, hidden activation).
    per_row = 4 * n * x_bytes + 4 * (h + 3 * n)
    # Grid-invariant operands (weights, fused params, b1), double-buffered.
    fixed = 2 * (2 * n * h * w_bytes + 4 * (8 * n + h))
    if fixed >= budget:
        warnings.warn(
            "dense_residual_apply: resident weights (%d bytes) exceed the VMEM "
            "budget (%d bytes); the row tile collapses to 8 (large perf cliff)."
            % (fixed, budget))
        # TODO(synk): for N/H where the whole weights no longer fit VMEM, add an
        # inner "arbitrary" grid axis over H (tile W1 columns / W2 rows with a
        # (tm, N) f32 accumulator + pl.when init/finalize); mandatory first on
        # v7x (64 MiB VMEM). Single-buffering the constant operands would also
        # roughly halve `fixed` there.
    tm_cap = max(8, (budget - fixed) // per_row // 8 * 8)

    if rows <= 8:
        tm_eff = rows                                   # single full-extent block
    else:
        tm_req = max(8, min(int(tm), tm_cap))
        n_steps = max(pl.cdiv(rows, tm_req), 2)         # >= 2 steps: v7x megacore
        tm_eff = min(_round_up(pl.cdiv(rows, n_steps), 8), tm_cap)
    grid_m = pl.cdiv(rows, tm_eff)                      # ragged tail masked by Pallas

    row_spec = pl.BlockSpec((tm_eff, n), lambda i: (i, 0))

    def const_spec(shape):
        # Grid-invariant operand: same block every step -> DMA'd only once.
        return pl.BlockSpec(shape, lambda i: (0, 0))

    out = pl.pallas_call(
        _dense_residual_kernel,
        out_shape=jax.ShapeDtypeStruct((rows, n), x.dtype),
        grid_spec=pltpu.PrefetchScalarGridSpec(
            num_scalar_prefetch=0,
            grid=(grid_m,),
            in_specs=[
                row_spec,                 # x rows
                const_spec((8, n)),       # [ln_w, ln_b, b2, gamma, 0, 0, 0, 0]
                const_spec((1, h)),       # b1
                const_spec((n, h)),       # W1^T
                const_spec((h, n)),       # W2^T
            ],
            out_specs=row_spec,
        ),
        compiler_params=pltpu.CompilerParams(
            dimension_semantics=("parallel",),
            vmem_limit_bytes=vmem_limit),
    )(x2, params, b1_row, w1, w2)

    return out.reshape(orig_shape)


def dense_residual_layer(x, ln_w, ln_b, w1_t, b1, w2_t, b2, gamma, *,
                         tm=1024, weight_dtype=jnp.bfloat16):
    """Convenience wrapper (packs parameters every call). For repeated calls,
    hoist prepare_dense_residual_params() out of the loop and use
    dense_residual_apply directly."""
    prepared = prepare_dense_residual_params(
        ln_w, ln_b, w1_t, b1, w2_t, b2, gamma, weight_dtype=weight_dtype)
    return dense_residual_apply(x, *prepared, tm=tm)


def _reference(x, ln_w, ln_b, w1_t, b1, w2_t, b2, gamma):
    mean = jnp.mean(x, axis=-1, keepdims=True)
    var = jnp.mean((x - mean) ** 2, axis=-1, keepdims=True)
    normed = (x - mean) / jnp.sqrt(var + LN_EPS) * ln_w + ln_b
    h = jnp.maximum(normed @ w1_t + b1, 0.0)
    return x + (h @ w2_t + b2) * gamma


if __name__ == "__main__":
    n_neurons, mult = 64, 2
    hidden = n_neurons * mult
    batch, seq = 4, 101            # 404 rows: exercises the ragged-tail tile path

    key = jax.random.PRNGKey(0)
    kx, k1, kb1, k2, kb2, kg = jax.random.split(key, 6)

    x = jax.random.normal(kx, (batch, seq, n_neurons), dtype=jnp.float32)

    # PyTorch-style deterministic parameter init.
    ln_w = jnp.ones((n_neurons,), jnp.float32)
    ln_b = jnp.zeros((n_neurons,), jnp.float32)
    bound1 = 1.0 / float(n_neurons) ** 0.5
    w1 = jax.random.uniform(k1, (hidden, n_neurons), jnp.float32, -bound1, bound1)
    b1 = jax.random.uniform(kb1, (hidden,), jnp.float32, -bound1, bound1)
    bound2 = 1.0 / float(hidden) ** 0.5
    w2 = jax.random.uniform(k2, (n_neurons, hidden), jnp.float32, -bound2, bound2)
    b2 = jax.random.uniform(kb2, (n_neurons,), jnp.float32, -bound2, bound2)

    # Pass transposed weights so the kernel does plain (row, in) @ (in, out).
    w1_t, w2_t = w1.T, w2.T        # (N, H), (H, N)

    # 1) module-default gamma (1e-6): branch contribution is tiny -> tight tol.
    gamma0 = jnp.full((n_neurons,), 1e-6, jnp.float32)
    prep0 = prepare_dense_residual_params(ln_w, ln_b, w1_t, b1, w2_t, b2, gamma0)
    out0 = jax.block_until_ready(dense_residual_apply(x, *prep0))
    ref0 = _reference(x, ln_w, ln_b, w1_t, b1, w2_t, b2, gamma0)
    assert out0.shape == x.shape
    assert jnp.allclose(out0, ref0, atol=1e-5, rtol=1e-5), "mismatch (gamma=1e-6)"

    # 2) O(1) gamma exercises the branch path; bf16 MXU weights -> looser tol.
    gamma1 = jax.random.normal(kg, (n_neurons,), jnp.float32) * 0.5
    prep1 = prepare_dense_residual_params(ln_w, ln_b, w1_t, b1, w2_t, b2, gamma1)
    out1 = jax.block_until_ready(dense_residual_apply(x, *prep1))
    ref1 = _reference(x, ln_w, ln_b, w1_t, b1, w2_t, b2, gamma1)
    assert jnp.allclose(out1, ref1, atol=3e-2, rtol=3e-2), "mismatch (gamma~O(1))"

    print("KERNEL_OK")
</pallas_src>

<mosaic_0001>
module attributes {stable_mosaic.version = 11 : i64} {
  func.func @_dense_residual_kernel(%arg0: i32, %arg1: memref<208x64xf32, #tpu.memory_space<vmem>>, %arg2: memref<8x64xf32, #tpu.memory_space<vmem>>, %arg3: memref<1x128xf32, #tpu.memory_space<vmem>>, %arg4: memref<64x128xbf16, #tpu.memory_space<vmem>>, %arg5: memref<128x64xbf16, #tpu.memory_space<vmem>>, %arg6: memref<208x64xf32, #tpu.memory_space<vmem>>) attributes {dimension_semantics = [#tpu.dimension_semantics<parallel>], iteration_bounds = array<i64: 2>, scalar_prefetch = 0 : i64, scratch_operands = 0 : i64, tpu.core_type = #tpu.core_type<tc>, window_params = [{transform_indices = @transform_0, window_bounds = array<i64: 208, 64>}, {pipeline_mode = #tpu.pipeline_mode<synchronous>, transform_indices = @transform_1, window_bounds = array<i64: 8, 64>}, {pipeline_mode = #tpu.pipeline_mode<synchronous>, transform_indices = @transform_2, window_bounds = array<i64: 1, 128>}, {pipeline_mode = #tpu.pipeline_mode<synchronous>, transform_indices = @transform_3, window_bounds = array<i64: 64, 128>}, {pipeline_mode = #tpu.pipeline_mode<synchronous>, transform_indices = @transform_4, window_bounds = array<i64: 128, 64>}, {transform_indices = @transform_5, window_bounds = array<i64: 208, 64>}]} {
    %c0 = arith.constant 0 : index
    %c0_0 = arith.constant 0 : index
    %0 = vector.load %arg1[%c0, %c0_0] : memref<208x64xf32, #tpu.memory_space<vmem>>, vector<208x64xf32>
    %c0_1 = arith.constant 0 : index
    %c0_2 = arith.constant 0 : index
    %1 = vector.load %arg2[%c0_1, %c0_2] : memref<8x64xf32, #tpu.memory_space<vmem>>, vector<8x64xf32>
    %2 = vector.extract_strided_slice %1 {offsets = [0, 0], sizes = [1, 64], strides = [1, 1]} : vector<8x64xf32> to vector<1x64xf32>
    %3 = vector.extract_strided_slice %1 {offsets = [1, 0], sizes = [1, 64], strides = [1, 1]} : vector<8x64xf32> to vector<1x64xf32>
    %4 = vector.extract_strided_slice %1 {offsets = [2, 0], sizes = [1, 64], strides = [1, 1]} : vector<8x64xf32> to vector<1x64xf32>
    %5 = vector.extract_strided_slice %1 {offsets = [3, 0], sizes = [1, 64], strides = [1, 1]} : vector<8x64xf32> to vector<1x64xf32>
    %cst = arith.constant dense<0.000000e+00> : vector<208xf32>
    %6 = vector.multi_reduction <add>, %0, %cst [1] : vector<208x64xf32> to vector<208xf32>
    %7 = vector.shape_cast %6 : vector<208xf32> to vector<208x1xf32>
    %cst_3 = arith.constant 1.562500e-02 : f32
    %8 = vector.broadcast %cst_3 : f32 to vector<208x1xf32>
    %9 = arith.mulf %7, %8 : vector<208x1xf32>
    %10 = vector.broadcast %9 : vector<208x1xf32> to vector<208x64xf32>
    %11 = arith.subf %0, %10 : vector<208x64xf32>
    %12 = arith.mulf %11, %11 : vector<208x64xf32>
    %cst_4 = arith.constant dense<0.000000e+00> : vector<208xf32>
    %13 = vector.multi_reduction <add>, %12, %cst_4 [1] : vector<208x64xf32> to vector<208xf32>
    %14 = vector.shape_cast %13 : vector<208xf32> to vector<208x1xf32>
    %cst_5 = arith.constant 1.562500e-02 : f32
    %15 = vector.broadcast %cst_5 : f32 to vector<208x1xf32>
    %16 = arith.mulf %14, %15 : vector<208x1xf32>
    %cst_6 = arith.constant 9.99999974E-6 : f32
    %17 = vector.broadcast %cst_6 : f32 to vector<208x1xf32>
    %18 = arith.addf %16, %17 : vector<208x1xf32>
    %19 = math.rsqrt %18 : vector<208x1xf32>
    %20 = vector.broadcast %19 : vector<208x1xf32> to vector<208x64xf32>
    %21 = arith.mulf %11, %20 : vector<208x64xf32>
    %22 = vector.broadcast %2 : vector<1x64xf32> to vector<208x64xf32>
    %23 = arith.mulf %21, %22 : vector<208x64xf32>
    %24 = vector.broadcast %3 : vector<1x64xf32> to vector<208x64xf32>
    %25 = arith.addf %23, %24 : vector<208x64xf32>
    %26 = arith.truncf %25 : vector<208x64xf32> to vector<208x64xbf16>
    %c0_7 = arith.constant 0 : index
    %c0_8 = arith.constant 0 : index
    %27 = vector.load %arg4[%c0_7, %c0_8] : memref<64x128xbf16, #tpu.memory_space<vmem>>, vector<64x128xbf16>
    %cst_9 = arith.constant dense<0.000000e+00> : vector<208x128xf32>
    %28 = tpu.matmul %26, %27, %cst_9 {dimension_numbers = #tpu.dot_dimension_numbers<[1], [0], [0], [1], [0, 0, 1, 1], [], []>} : vector<208x64xbf16>, vector<64x128xbf16>, vector<208x128xf32> -> vector<208x128xf32>
    %c0_10 = arith.constant 0 : index
    %c0_11 = arith.constant 0 : index
    %29 = vector.load %arg3[%c0_10, %c0_11] : memref<1x128xf32, #tpu.memory_space<vmem>>, vector<1x128xf32>
    %30 = vector.broadcast %29 : vector<1x128xf32> to vector<208x128xf32>
    %31 = arith.addf %28, %30 : vector<208x128xf32>
    %cst_12 = arith.constant 0.000000e+00 : f32
    %32 = vector.broadcast %cst_12 : f32 to vector<208x128xf32>
    %33 = arith.maximumf %31, %32 : vector<208x128xf32>
    %34 = arith.truncf %33 : vector<208x128xf32> to vector<208x128xbf16>
    %c0_13 = arith.constant 0 : index
    %c0_14 = arith.constant 0 : index
    %35 = vector.load %arg5[%c0_13, %c0_14] : memref<128x64xbf16, #tpu.memory_space<vmem>>, vector<128x64xbf16>
    %cst_15 = arith.constant dense<0.000000e+00> : vector<208x64xf32>
    %36 = tpu.matmul %34, %35, %cst_15 {dimension_numbers = #tpu.dot_dimension_numbers<[1], [0], [0], [1], [0, 0, 1, 1], [], []>} : vector<208x128xbf16>, vector<128x64xbf16>, vector<208x64xf32> -> vector<208x64xf32>
    %37 = vector.broadcast %4 : vector<1x64xf32> to vector<208x64xf32>
    %38 = arith.addf %36, %37 : vector<208x64xf32>
    %39 = vector.broadcast %5 : vector<1x64xf32> to vector<208x64xf32>
    %40 = arith.mulf %38, %39 : vector<208x64xf32>
    %41 = arith.addf %0, %40 : vector<208x64xf32>
    %c0_16 = arith.constant 0 : index
    %c0_17 = arith.constant 0 : index
    %42 = vector.load %arg6[%c0_16, %c0_17] : memref<208x64xf32, #tpu.memory_space<vmem>>, vector<208x64xf32>
    tpu.vector_store %arg6[%c0_16, %c0_17], %41 {strides = array<i32>} : memref<208x64xf32, #tpu.memory_space<vmem>>, vector<208x64xf32>,
    return
  }
  func.func @transform_0(%arg0: i32) -> (i32, i32) {
    %c0_i32 = arith.constant 0 : i32
    %c0_i32_0 = arith.constant 0 : i32
    return %arg0, %c0_i32 : i32, i32
  }
  func.func @transform_1(%arg0: i32) -> (i32, i32) {
    %c0_i32 = arith.constant 0 : i32
    %c0_i32_0 = arith.constant 0 : i32
    %c0_i32_1 = arith.constant 0 : i32
    return %c0_i32, %c0_i32_0 : i32, i32
  }
  func.func @transform_2(%arg0: i32) -> (i32, i32) {
    %c0_i32 = arith.constant 0 : i32
    %c0_i32_0 = arith.constant 0 : i32
    %c0_i32_1 = arith.constant 0 : i32
    return %c0_i32, %c0_i32_0 : i32, i32
  }
  func.func @transform_3(%arg0: i32) -> (i32, i32) {
    %c0_i32 = arith.constant 0 : i32
    %c0_i32_0 = arith.constant 0 : i32
    %c0_i32_1 = arith.constant 0 : i32
    return %c0_i32, %c0_i32_0 : i32, i32
  }
  func.func @transform_4(%arg0: i32) -> (i32, i32) {
    %c0_i32 = arith.constant 0 : i32
    %c0_i32_0 = arith.constant 0 : i32
    %c0_i32_1 = arith.constant 0 : i32
    return %c0_i32, %c0_i32_0 : i32, i32
  }
  func.func @transform_5(%arg0: i32) -> (i32, i32) {
    %c0_i32 = arith.constant 0 : i32
    %c0_i32_0 = arith.constant 0 : i32
    return %arg0, %c0_i32 : i32, i32
  }
}

</mosaic_0001>

<llo_original>
// kernel: dense_residual_apply.1
$region0: #{dense_residual_apply.1}
  #allocation0 [shape = 'u32[]', space=smem, size = 0x4, offset = 0x4, fixed_abs, tag = 'smem constant byte address 0x4 - core index']
  #allocation1 [shape = 'u32[144,128]{1,0:T(1,128)}', space=vmem, size = 0x12000, scoped, tag = 'internal scratch']
  %s0 = inlined_call_operand.vmem [shape: f32[404,64], index: 0, kind: input, shape index: {}]
  %s1 = inlined_call_operand.vmem [shape: f32[8,64], index: 1, kind: input, shape index: {}]
  %s2 = inlined_call_operand.vmem [shape: f32[1,128], index: 2, kind: input, shape index: {}]
  %s3 = inlined_call_operand.vmem [shape: bf16[64,128], index: 3, kind: input, shape index: {}]
  %s4 = inlined_call_operand.vmem [shape: bf16[128,64], index: 4, kind: input, shape index: {}]
  %s5 = inlined_call_operand.vmem [shape: f32[404,64], index: 5, kind: output, shape index: {}]
  %s6 = sld [smem:[#allocation0]]
  $region101: #{dense_residual_apply.1} parent=0
    _
  %s8 = ssub.s32 1, %s6
  %s9 = scalar_select 0, %s8, %s6
  $region1: #{dense_residual_apply.1} parent=0
    #allocation2 [shape = 'u8[212992]{0}', space=vmem, size = 0x34000, scoped, tag = 'output window, operand 0']
    loop: start=0, step=1, limit=4
    $region2: #{dense_residual_apply.1} parent=1 // loop_pre_header
      _
    $region3: #{dense_residual_apply.1} parent=1 // loop_header
      %s11 = sphi 0, %s15
      %p12 = scmp.ge.s32.totalorder %s11, 4
      %s21 = sphi 0, %s23
      %s24 = sphi 0, %s21
      %s25 = sphi 0, %s24
      %s41 = sphi 0, %s25
      %s45 = sphi 0, %s45
      %s47 = sphi 0, %s45
      %s48 = sphi 0, %s47
      %s62 = sphi 0, %s48
      %s66 = sphi 0, %s66
      %s68 = sphi 0, %s66
      %s69 = sphi 0, %s68
      %s83 = sphi 0, %s69
      %s87 = sphi 0, %s87
      %s89 = sphi 0, %s87
      %s90 = sphi 0, %s89
      %s104 = sphi 0, %s90
      %s108 = sphi 0, %s108
      %s110 = sphi 0, %s108
      %s111 = sphi 0, %s110
      %s125 = sphi 0, %s111
      %s131 = sphi 0, %s133
      %s134 = sphi 0, %s131
      %s135 = sphi 0, %s134
      %s151 = sphi 0, %s135
    $region4: #{dense_residual_apply.1} parent=1 // loop_header_branch
      %14 = sbr.rel (%p12) target = $region8
    $region5: #{dense_residual_apply.1} parent=1 // loop_body
      %s16 = ssub.s32 %s11, 1
      %s17 = ssub.s32 %s11, 2
      %s18 = sadd.s32 %s11, 1
      %s19 = ssub.s32 %s11, %s18
      %p20 = scmp.eq.s32.totalorder %s19, 0
      %s22 = sadd.s32 %s21, 1
      %s23 = scalar_select %p20, %s21, %s22
      %p26 = pneg %p20
      %p27 = scmp.eq.s32.totalorder %s11, 1
      %p28 = por %p26, %p27
      %p29 = scmp.ne.s32.totalorder %s21, %s24
      %p30 = scmp.eq.s32.totalorder %s11, 0
      %p31 = por %p29, %p30
      %p32 = scmp.ne.s32.totalorder %s21, %s24
      %p33 = scmp.eq.s32.totalorder %s16, 1
      %p34 = por %p32, %p33
      %p35 = scmp.ne.s32.totalorder %s24, %s25
      %p36 = scmp.eq.s32.totalorder %s16, 0
      %p37 = por %p35, %p36
      %p38 = scmp.ne.s32.totalorder %s24, %s25
      %p39 = scmp.eq.s32.totalorder %s17, 1
      %p40 = por %p38, %p39
      %p42 = scmp.ne.s32.totalorder %s25, %s41
      %p43 = scmp.eq.s32.totalorder %s17, 0
      %p44 = por %p42, %p43
      %s46 = sadd.s32 %s45, 1
      %p49 = scmp.eq.s32.totalorder %s11, 1
      %p50 = scmp.ne.s32.totalorder %s45, %s47
      %p51 = scmp.eq.s32.totalorder %s11, 0
      %p52 = por %p50, %p51
      %p53 = scmp.ne.s32.totalorder %s45, %s47
      %p54 = scmp.eq.s32.totalorder %s16, 1
      %p55 = por %p53, %p54
      %p56 = scmp.ne.s32.totalorder %s47, %s48
      %p57 = scmp.eq.s32.totalorder %s16, 0
      %p58 = por %p56, %p57
      %p59 = scmp.ne.s32.totalorder %s47, %s48
      %p60 = scmp.eq.s32.totalorder %s17, 1
      %p61 = por %p59, %p60
      %p63 = scmp.ne.s32.totalorder %s48, %s62
      %p64 = scmp.eq.s32.totalorder %s17, 0
      %p65 = por %p63, %p64
      %s67 = sadd.s32 %s66, 1
      %p70 = scmp.eq.s32.totalorder %s11, 1
      %p71 = scmp.ne.s32.totalorder %s66, %s68
      %p72 = scmp.eq.s32.totalorder %s11, 0
      %p73 = por %p71, %p72
      %p74 = scmp.ne.s32.totalorder %s66, %s68
      %p75 = scmp.eq.s32.totalorder %s16, 1
      %p76 = por %p74, %p75
      %p77 = scmp.ne.s32.totalorder %s68, %s69
      %p78 = scmp.eq.s32.totalorder %s16, 0
      %p79 = por %p77, %p78
      %p80 = scmp.ne.s32.totalorder %s68, %s69
      %p81 = scmp.eq.s32.totalorder %s17, 1
      %p82 = por %p80, %p81
      %p84 = scmp.ne.s32.totalorder %s69, %s83
      %p85 = scmp.eq.s32.totalorder %s17, 0
      %p86 = por %p84, %p85
      %s88 = sadd.s32 %s87, 1
      %p91 = scmp.eq.s32.totalorder %s11, 1
      %p92 = scmp.ne.s32.totalorder %s87, %s89
      %p93 = scmp.eq.s32.totalorder %s11, 0
      %p94 = por %p92, %p93
      %p95 = scmp.ne.s32.totalorder %s87, %s89
      %p96 = scmp.eq.s32.totalorder %s16, 1
      %p97 = por %p95, %p96
      %p98 = scmp.ne.s32.totalorder %s89, %s90
      %p99 = scmp.eq.s32.totalorder %s16, 0
      %p100 = por %p98, %p99
      %p101 = scmp.ne.s32.totalorder %s89, %s90
      %p102 = scmp.eq.s32.totalorder %s17, 1
      %p103 = por %p101, %p102
      %p105 = scmp.ne.s32.totalorder %s90, %s104
      %p106 = scmp.eq.s32.totalorder %s17, 0
      %p107 = por %p105, %p106
      %s109 = sadd.s32 %s108, 1
      %p112 = scmp.eq.s32.totalorder %s11, 1
      %p113 = scmp.ne.s32.totalorder %s108, %s110
      %p114 = scmp.eq.s32.totalorder %s11, 0
      %p115 = por %p113, %p114
      %p116 = scmp.ne.s32.totalorder %s108, %s110
      %p117 = scmp.eq.s32.totalorder %s16, 1
      %p118 = por %p116, %p117
      %p119 = scmp.ne.s32.totalorder %s110, %s111
      %p120 = scmp.eq.s32.totalorder %s16, 0
      %p121 = por %p119, %p120
      %p122 = scmp.ne.s32.totalorder %s110, %s111
      %p123 = scmp.eq.s32.totalorder %s17, 1
      %p124 = por %p122, %p123
      %p126 = scmp.ne.s32.totalorder %s111, %s125
      %p127 = scmp.eq.s32.totalorder %s17, 0
      %p128 = por %p126, %p127
      %s129 = ssub.s32 %s11, %s18
      %p130 = scmp.eq.s32.totalorder %s129, 0
      %s132 = sadd.s32 %s131, 1
      %s133 = scalar_select %p130, %s131, %s132
      %p136 = pneg %p130
      %p137 = scmp.eq.s32.totalorder %s11, 1
      %p138 = por %p136, %p137
      %p139 = scmp.ne.s32.totalorder %s131, %s134
      %p140 = scmp.eq.s32.totalorder %s11, 0
      %p141 = por %p139, %p140
      %p142 = scmp.ne.s32.totalorder %s131, %s134
      %p143 = scmp.eq.s32.totalorder %s16, 1
      %p144 = por %p142, %p143
      %p145 = scmp.ne.s32.totalorder %s134, %s135
      %p146 = scmp.eq.s32.totalorder %s16, 0
      %p147 = por %p145, %p146
      %p148 = scmp.ne.s32.totalorder %s134, %s135
      %p149 = scmp.eq.s32.totalorder %s17, 1
      %p150 = por %p148, %p149
      %p152 = scmp.ne.s32.totalorder %s135, %s151
      %p153 = scmp.eq.s32.totalorder %s17, 0
      %p154 = por %p152, %p153
      %p155 = scmp.le.s32.totalorder 1, %s11
      %p156 = scmp.lt.s32.totalorder %s11, 3
      %p157 = pnand %p155, %p156
      %p158 = pneg %p157
      // Predicated region
      $region9: #{dense_residual_apply.1} parent=5 // pred_check
        _
      $region10: #{dense_residual_apply.1} parent=5 // pred_check_branch
        %160 = sbr.rel (%p157) target = $region12
      $region11: #{dense_residual_apply.1} parent=5 // pred_region
        %s161 = ssub.s32 %s11, 1
        // Predicated region
        $region13: #{dense_residual_apply.1} parent=11 // pred_check
          %p162 = pneg %p58
        $region14: #{dense_residual_apply.1} parent=11 // pred_check_branch
          %164 = sbr.rel (%p162) target = $region16
        $region15: #{dense_residual_apply.1} parent=11 // pred_region
          _
        $region16: #{dense_residual_apply.1} parent=11 // pred_fallthru
          _
        // Predicated region
        $region17: #{dense_residual_apply.1} parent=11 // pred_check
          %p165 = pneg %p79
        $region18: #{dense_residual_apply.1} parent=11 // pred_check_branch
          %167 = sbr.rel (%p165) target = $region20
        $region19: #{dense_residual_apply.1} parent=11 // pred_region
          _
        $region20: #{dense_residual_apply.1} parent=11 // pred_fallthru
          _
        // Predicated region
        $region21: #{dense_residual_apply.1} parent=11 // pred_check
          %p168 = pneg %p100
        $region22: #{dense_residual_apply.1} parent=11 // pred_check_branch
          %170 = sbr.rel (%p168) target = $region24
        $region23: #{dense_residual_apply.1} parent=11 // pred_region
          _
        $region24: #{dense_residual_apply.1} parent=11 // pred_fallthru
          _
        // Predicated region
        $region25: #{dense_residual_apply.1} parent=11 // pred_check
          %p171 = pneg %p121
        $region26: #{dense_residual_apply.1} parent=11 // pred_check_branch
          %173 = sbr.rel (%p171) target = $region28
        $region27: #{dense_residual_apply.1} parent=11 // pred_region
          _
        $region28: #{dense_residual_apply.1} parent=11 // pred_fallthru
          _
      $region12: #{dense_residual_apply.1} parent=5 // pred_fallthru
        _
      %p174 = scmp.lt.s32.totalorder %s11, 2
      // Predicated region
      $region29: #{dense_residual_apply.1} parent=5 // pred_check
        %p175 = pneg %p174
      $region30: #{dense_residual_apply.1} parent=5 // pred_check_branch
        %177 = sbr.rel (%p175) target = $region32
      $region31: #{dense_residual_apply.1} parent=5 // pred_region
        // Predicated region
        $region33: #{dense_residual_apply.1} parent=31 // pred_check
          %p178 = pneg %p31
        $region34: #{dense_residual_apply.1} parent=31 // pred_check_branch
          %180 = sbr.rel (%p178) target = $region36
        $region35: #{dense_residual_apply.1} parent=31 // pred_region
          %s181 = smul.u32 26, %s11
          %s182 = ssub.s32 51, %s181
          %p183 = scmp.lt.s32.totalorder %s182, 26
          %s184 = scalar_select %p183, %s182, 26
          %s185 = smul.u32 128, %s184
          %p186 = scmp.lt.s32.totalorder %s181, 50
          %s187 = scalar_select %p186, %s181, 50
          %s188 = smul.addr %s187, 8
          %s189 = scalar_lea.vmem %s0, %s188
          %s190 = smul.u32 26, %s11
          %s191 = ssub.s32 51, %s190
          %p192 = scmp.lt.s32.totalorder %s191, 26
          %s193 = scalar_select %p192, %s191, 26
          %s194 = smul.u32 128, %s193
        $region36: #{dense_residual_apply.1} parent=31 // pred_fallthru
          _
      $region32: #{dense_residual_apply.1} parent=5 // pred_fallthru
        _
      %p195 = scmp.le.s32.totalorder 1, %s11
      %p196 = scmp.lt.s32.totalorder %s11, 3
      %p197 = pnand %p195, %p196
      %p198 = pneg %p197
      // Predicated region
      $region37: #{dense_residual_apply.1} parent=5 // pred_check
        _
      $region38: #{dense_residual_apply.1} parent=5 // pred_check_branch
        %200 = sbr.rel (%p197) target = $region40
      $region39: #{dense_residual_apply.1} parent=5 // pred_region
        %s201 = ssub.s32 %s11, 1
        %s202 = smul.u32 26, %s16
        %s203 = ssub.s32 51, %s202
        %p204 = scmp.lt.s32.totalorder %s203, 26
        %s205 = scalar_select %p204, %s203, 26
        %s206 = smul.u32 128, %s205
        %p207 = scmp.lt.s32.totalorder %s202, 50
        %s208 = scalar_select %p207, %s202, 50
        %s209 = smul.addr %s208, 8
        %s210 = scalar_lea.vmem %s0, %s209
        %p211 = pneg %p37
        %p212 = pneg %p34
        %p213 = pneg %p58
        %p214 = pneg %p55
        %p215 = pneg %p79
        %p216 = pneg %p76
        %p217 = pneg %p100
        %p218 = pneg %p97
        %p219 = pneg %p121
        %p220 = pneg %p118
        %p221 = pneg %p147
        %p222 = pneg %p144
        %s223 = sand.u32 %s134, 1
        %s224 = sand.u32 %s134, 1
        %s225 = smul.addr %s224, 208
        %s226 = scalar_lea.vmem [#allocation2], %s225
        %s227 = smul.u32 26, %s16
        %s228 = ssub.s32 51, %s227
        %p229 = scmp.lt.s32.totalorder %s228, 26
        %s230 = scalar_select %p229, %s228, 26
        %s231 = smul.u32 128, %s230
        %p232 = scmp.lt.s32.totalorder %s227, 50
        %s233 = scalar_select %p232, %s227, 50
        %s234 = smul.addr %s233, 8
        %s235 = scalar_lea.vmem %s0, %s234
        %s236 = smul.u32 26, %s16
        %s237 = ssub.s32 51, %s236
        %p238 = scmp.lt.s32.totalorder %s237, 26
        %s239 = scalar_select %p238, %s237, 26
        %s240 = smul.u32 128, %s239
        %s241 = smul.u32 26, %s16
        %s242 = ssub.s32 51, %s241
        %p243 = scmp.lt.s32.totalorder %s242, 26
        %s244 = scalar_select %p243, %s242, 26
        %s245 = smul.u32 128, %s244
        %v247 = vld [vmem:[%s235] sm:$0xff]
        %v248 = vld [vmem:[%s235 + $0x8] sm:$0xff]
        %v249 = vld [vmem:[%s235 + $0x10] sm:$0xff]
        %v250 = vld [vmem:[%s235 + $0x18] sm:$0xff]
        %v251 = vld [vmem:[%s235 + $0x20] sm:$0xff]
        %v252 = vld [vmem:[%s235 + $0x28] sm:$0xff]
        %v253 = vld [vmem:[%s235 + $0x30] sm:$0xff]
        %v254 = vld [vmem:[%s235 + $0x38] sm:$0xff]
        %v255 = vld [vmem:[%s235 + $0x40] sm:$0xff]
        %v256 = vld [vmem:[%s235 + $0x48] sm:$0xff]
        %v257 = vld [vmem:[%s235 + $0x50] sm:$0xff]
        %v258 = vld [vmem:[%s235 + $0x58] sm:$0xff]
        %v259 = vld [vmem:[%s235 + $0x60] sm:$0xff]
        %v260 = vld [vmem:[%s235 + $0x68] sm:$0xff]
        %v261 = vld [vmem:[%s235 + $0x70] sm:$0xff]
        %v262 = vld [vmem:[%s235 + $0x78] sm:$0xff]
        %v263 = vld [vmem:[%s235 + $0x80] sm:$0xff]
        %v264 = vld [vmem:[%s235 + $0x88] sm:$0xff]
        %v265 = vld [vmem:[%s235 + $0x90] sm:$0xff]
        %v266 = vld [vmem:[%s235 + $0x98] sm:$0xff]
        %v267 = vld [vmem:[%s235 + $0xa0] sm:$0xff]
        %v268 = vld [vmem:[%s235 + $0xa8] sm:$0xff]
        %v269 = vld [vmem:[%s235 + $0xb0] sm:$0xff]
        %v270 = vld [vmem:[%s235 + $0xb8] sm:$0xff]
        %v271 = vld [vmem:[%s235 + $0xc0] sm:$0xff]
        %v272 = vld [vmem:[%s235 + $0xc8] sm:$0xff]
        %v273 = vld [vmem:[%s1] sm:$0xff]
        %vm274 = vcmask 523264
        %v275 = vsel %vm274, %v247, 0.0
        %276 = vadd.xlane.f32.xlu0 %v275
        %v277 = vpop.xlane.xlu0 %276
        %v278 = vsel %vm274, %v248, 0.0
        %279 = vadd.xlane.f32.xlu0 %v278
        %v280 = vpop.xlane.xlu0 %279
        %v281 = vsel %vm274, %v249, 0.0
        %282 = vadd.xlane.f32.xlu0 %v281
        %v283 = vpop.xlane.xlu0 %282
        %v284 = vsel %vm274, %v250, 0.0
        %285 = vadd.xlane.f32.xlu0 %v284
        %v286 = vpop.xlane.xlu0 %285
        %v287 = vsel %vm274, %v251, 0.0
        %288 = vadd.xlane.f32.xlu0 %v287
        %v289 = vpop.xlane.xlu0 %288
        %v290 = vsel %vm274, %v252, 0.0
        %291 = vadd.xlane.f32.xlu0 %v290
        %v292 = vpop.xlane.xlu0 %291
        %v293 = vsel %vm274, %v253, 0.0
        %294 = vadd.xlane.f32.xlu0 %v293
        %v295 = vpop.xlane.xlu0 %294
        %v296 = vsel %vm274, %v254, 0.0
        %297 = vadd.xlane.f32.xlu0 %v296
        %v298 = vpop.xlane.xlu0 %297
        %v299 = vsel %vm274, %v255, 0.0
        %300 = vadd.xlane.f32.xlu0 %v299
        %v301 = vpop.xlane.xlu0 %300
        %v302 = vsel %vm274, %v256, 0.0
        %303 = vadd.xlane.f32.xlu0 %v302
        %v304 = vpop.xlane.xlu0 %303
        %v305 = vsel %vm274, %v257, 0.0
        %306 = vadd.xlane.f32.xlu0 %v305
        %v307 = vpop.xlane.xlu0 %306
        %v308 = vsel %vm274, %v258, 0.0
        %309 = vadd.xlane.f32.xlu0 %v308
        %v310 = vpop.xlane.xlu0 %309
        %v311 = vsel %vm274, %v259, 0.0
        %312 = vadd.xlane.f32.xlu0 %v311
        %v313 = vpop.xlane.xlu0 %312
        %v314 = vsel %vm274, %v260, 0.0
        %315 = vadd.xlane.f32.xlu0 %v314
        %v316 = vpop.xlane.xlu0 %315
        %v317 = vsel %vm274, %v261, 0.0
        %318 = vadd.xlane.f32.xlu0 %v317
        %v319 = vpop.xlane.xlu0 %318
        %v320 = vsel %vm274, %v262, 0.0
        %321 = vadd.xlane.f32.xlu0 %v320
        %v322 = vpop.xlane.xlu0 %321
        %v323 = vsel %vm274, %v263, 0.0
        %324 = vadd.xlane.f32.xlu0 %v323
        %v325 = vpop.xlane.xlu0 %324
        %v326 = vsel %vm274, %v264, 0.0
        %327 = vadd.xlane.f32.xlu0 %v326
        %v328 = vpop.xlane.xlu0 %327
        %v329 = vsel %vm274, %v265, 0.0
        %330 = vadd.xlane.f32.xlu0 %v329
        %v331 = vpop.xlane.xlu0 %330
        %v332 = vsel %vm274, %v266, 0.0
        %333 = vadd.xlane.f32.xlu0 %v332
        %v334 = vpop.xlane.xlu0 %333
        %v335 = vsel %vm274, %v267, 0.0
        %336 = vadd.xlane.f32.xlu0 %v335
        %v337 = vpop.xlane.xlu0 %336
        %v338 = vsel %vm274, %v268, 0.0
        %339 = vadd.xlane.f32.xlu0 %v338
        %v340 = vpop.xlane.xlu0 %339
        %v341 = vsel %vm274, %v269, 0.0
        %342 = vadd.xlane.f32.xlu0 %v341
        %v343 = vpop.xlane.xlu0 %342
        %v344 = vsel %vm274, %v270, 0.0
        %345 = vadd.xlane.f32.xlu0 %v344
        %v346 = vpop.xlane.xlu0 %345
        %v347 = vsel %vm274, %v271, 0.0
        %348 = vadd.xlane.f32.xlu0 %v347
        %v349 = vpop.xlane.xlu0 %348
        %v350 = vsel %vm274, %v272, 0.0
        %351 = vadd.xlane.f32.xlu0 %v350
        %v352 = vpop.xlane.xlu0 %351
        %v353 = vmul.f32 %v277, 0.015625
        %v354 = vmul.f32 %v280, 0.015625
        %v355 = vmul.f32 %v283, 0.015625
        %v356 = vmul.f32 %v286, 0.015625
        %v357 = vmul.f32 %v289, 0.015625
        %v358 = vmul.f32 %v292, 0.015625
        %v359 = vmul.f32 %v295, 0.015625
        %v360 = vmul.f32 %v298, 0.015625
        %v361 = vmul.f32 %v301, 0.015625
        %v362 = vmul.f32 %v304, 0.015625
        %v363 = vmul.f32 %v307, 0.015625
        %v364 = vmul.f32 %v310, 0.015625
        %v365 = vmul.f32 %v313, 0.015625
        %v366 = vmul.f32 %v316, 0.015625
        %v367 = vmul.f32 %v319, 0.015625
        %v368 = vmul.f32 %v322, 0.015625
        %v369 = vmul.f32 %v325, 0.015625
        %v370 = vmul.f32 %v328, 0.015625
        %v371 = vmul.f32 %v331, 0.015625
        %v372 = vmul.f32 %v334, 0.015625
        %v373 = vmul.f32 %v337, 0.015625
        %v374 = vmul.f32 %v340, 0.015625
        %v375 = vmul.f32 %v343, 0.015625
        %v376 = vmul.f32 %v346, 0.015625
        %v377 = vmul.f32 %v349, 0.015625
        %v378 = vmul.f32 %v352, 0.015625
        %v379 = vsub.f32 %v247, %v353
        %v380 = vsub.f32 %v248, %v354
        %v381 = vsub.f32 %v249, %v355
        %v382 = vsub.f32 %v250, %v356
        %v383 = vsub.f32 %v251, %v357
        %v384 = vsub.f32 %v252, %v358
        %v385 = vsub.f32 %v253, %v359
        %v386 = vsub.f32 %v254, %v360
        %v387 = vsub.f32 %v255, %v361
        %v388 = vsub.f32 %v256, %v362
        %v389 = vsub.f32 %v257, %v363
        %v390 = vsub.f32 %v258, %v364
        %v391 = vsub.f32 %v259, %v365
        %v392 = vsub.f32 %v260, %v366
        %v393 = vsub.f32 %v261, %v367
        %v394 = vsub.f32 %v262, %v368
        %v395 = vsub.f32 %v263, %v369
        %v396 = vsub.f32 %v264, %v370
        %v397 = vsub.f32 %v265, %v371
        %v398 = vsub.f32 %v266, %v372
        %v399 = vsub.f32 %v267, %v373
        %v400 = vsub.f32 %v268, %v374
        %v401 = vsub.f32 %v269, %v375
        %v402 = vsub.f32 %v270, %v376
        %v403 = vsub.f32 %v271, %v377
        %v404 = vsub.f32 %v272, %v378
        %v405 = vmul.f32 %v379, %v379
        %v406 = vmul.f32 %v380, %v380
        %v407 = vmul.f32 %v381, %v381
        %v408 = vmul.f32 %v382, %v382
        %v409 = vmul.f32 %v383, %v383
        %v410 = vmul.f32 %v384, %v384
        %v411 = vmul.f32 %v385, %v385
        %v412 = vmul.f32 %v386, %v386
        %v413 = vmul.f32 %v387, %v387
        %v414 = vmul.f32 %v388, %v388
        %v415 = vmul.f32 %v389, %v389
        %v416 = vmul.f32 %v390, %v390
        %v417 = vmul.f32 %v391, %v391
        %v418 = vmul.f32 %v392, %v392
        %v419 = vmul.f32 %v393, %v393
        %v420 = vmul.f32 %v394, %v394
        %v421 = vmul.f32 %v395, %v395
        %v422 = vmul.f32 %v396, %v396
        %v423 = vmul.f32 %v397, %v397
        %v424 = vmul.f32 %v398, %v398
        %v425 = vmul.f32 %v399, %v399
        %v426 = vmul.f32 %v400, %v400
        %v427 = vmul.f32 %v401, %v401
        %v428 = vmul.f32 %v402, %v402
        %v429 = vmul.f32 %v403, %v403
        %v430 = vmul.f32 %v404, %v404
        %v431 = vsel %vm274, %v405, 0.0
        %432 = vadd.xlane.f32.xlu0 %v431
        %v433 = vpop.xlane.xlu0 %432
        %v434 = vsel %vm274, %v406, 0.0
        %435 = vadd.xlane.f32.xlu0 %v434
        %v436 = vpop.xlane.xlu0 %435
        %v437 = vsel %vm274, %v407, 0.0
        %438 = vadd.xlane.f32.xlu0 %v437
        %v439 = vpop.xlane.xlu0 %438
        %v440 = vsel %vm274, %v408, 0.0
        %441 = vadd.xlane.f32.xlu0 %v440
        %v442 = vpop.xlane.xlu0 %441
        %v443 = vsel %vm274, %v409, 0.0
        %444 = vadd.xlane.f32.xlu0 %v443
        %v445 = vpop.xlane.xlu0 %444
        %v446 = vsel %vm274, %v410, 0.0
        %447 = vadd.xlane.f32.xlu0 %v446
        %v448 = vpop.xlane.xlu0 %447
        %v449 = vsel %vm274, %v411, 0.0
        %450 = vadd.xlane.f32.xlu0 %v449
        %v451 = vpop.xlane.xlu0 %450
        %v452 = vsel %vm274, %v412, 0.0
        %453 = vadd.xlane.f32.xlu0 %v452
        %v454 = vpop.xlane.xlu0 %453
        %v455 = vsel %vm274, %v413, 0.0
        %456 = vadd.xlane.f32.xlu0 %v455
        %v457 = vpop.xlane.xlu0 %456
        %v458 = vsel %vm274, %v414, 0.0
        %459 = vadd.xlane.f32.xlu0 %v458
        %v460 = vpop.xlane.xlu0 %459
        %v461 = vsel %vm274, %v415, 0.0
        %462 = vadd.xlane.f32.xlu0 %v461
        %v463 = vpop.xlane.xlu0 %462
        %v464 = vsel %vm274, %v416, 0.0
        %465 = vadd.xlane.f32.xlu0 %v464
        %v466 = vpop.xlane.xlu0 %465
        %v467 = vsel %vm274, %v417, 0.0
        %468 = vadd.xlane.f32.xlu0 %v467
        %v469 = vpop.xlane.xlu0 %468
        %v470 = vsel %vm274, %v418, 0.0
        %471 = vadd.xlane.f32.xlu0 %v470
        %v472 = vpop.xlane.xlu0 %471
        %v473 = vsel %vm274, %v419, 0.0
        %474 = vadd.xlane.f32.xlu0 %v473
        %v475 = vpop.xlane.xlu0 %474
        %v476 = vsel %vm274, %v420, 0.0
        %477 = vadd.xlane.f32.xlu0 %v476
        %v478 = vpop.xlane.xlu0 %477
        %v479 = vsel %vm274, %v421, 0.0
        %480 = vadd.xlane.f32.xlu0 %v479
        %v481 = vpop.xlane.xlu0 %480
        %v482 = vsel %vm274, %v422, 0.0
        %483 = vadd.xlane.f32.xlu0 %v482
        %v484 = vpop.xlane.xlu0 %483
        %v485 = vsel %vm274, %v423, 0.0
        %486 = vadd.xlane.f32.xlu0 %v485
        %v487 = vpop.xlane.xlu0 %486
        %v488 = vsel %vm274, %v424, 0.0
        %489 = vadd.xlane.f32.xlu0 %v488
        %v490 = vpop.xlane.xlu0 %489
        %v491 = vsel %vm274, %v425, 0.0
        %492 = vadd.xlane.f32.xlu0 %v491
        %v493 = vpop.xlane.xlu0 %492
        %v494 = vsel %vm274, %v426, 0.0
        %495 = vadd.xlane.f32.xlu0 %v494
        %v496 = vpop.xlane.xlu0 %495
        %v497 = vsel %vm274, %v427, 0.0
        %498 = vadd.xlane.f32.xlu0 %v497
        %v499 = vpop.xlane.xlu0 %498
        %v500 = vsel %vm274, %v428, 0.0
        %501 = vadd.xlane.f32.xlu0 %v500
        %v502 = vpop.xlane.xlu0 %501
        %v503 = vsel %vm274, %v429, 0.0
        %504 = vadd.xlane.f32.xlu0 %v503
        %v505 = vpop.xlane.xlu0 %504
        %v506 = vsel %vm274, %v430, 0.0
        %507 = vadd.xlane.f32.xlu0 %v506
        %v508 = vpop.xlane.xlu0 %507
        %v509 = vmul.f32 %v433, 0.015625
        %v510 = vmul.f32 %v436, 0.015625
        %v511 = vmul.f32 %v439, 0.015625
        %v512 = vmul.f32 %v442, 0.015625
        %v513 = vmul.f32 %v445, 0.015625
        %v514 = vmul.f32 %v448, 0.015625
        %v515 = vmul.f32 %v451, 0.015625
        %v516 = vmul.f32 %v454, 0.015625
        %v517 = vmul.f32 %v457, 0.015625
        %v518 = vmul.f32 %v460, 0.015625
        %v519 = vmul.f32 %v463, 0.015625
        %v520 = vmul.f32 %v466, 0.015625
        %v521 = vmul.f32 %v469, 0.015625
        %v522 = vmul.f32 %v472, 0.015625
        %v523 = vmul.f32 %v475, 0.015625
        %v524 = vmul.f32 %v478, 0.015625
        %v525 = vmul.f32 %v481, 0.015625
        %v526 = vmul.f32 %v484, 0.015625
        %v527 = vmul.f32 %v487, 0.015625
        %v528 = vmul.f32 %v490, 0.015625
        %v529 = vmul.f32 %v493, 0.015625
        %v530 = vmul.f32 %v496, 0.015625
        %v531 = vmul.f32 %v499, 0.015625
        %v532 = vmul.f32 %v502, 0.015625
        %v533 = vmul.f32 %v505, 0.015625
        %v534 = vmul.f32 %v508, 0.015625
        %v535 = vadd.f32 %v509, 1e-05
        %v536 = vadd.f32 %v510, 1e-05
        %v537 = vadd.f32 %v511, 1e-05
        %v538 = vadd.f32 %v512, 1e-05
        %v539 = vadd.f32 %v513, 1e-05
        %v540 = vadd.f32 %v514, 1e-05
        %v541 = vadd.f32 %v515, 1e-05
        %v542 = vadd.f32 %v516, 1e-05
        %v543 = vadd.f32 %v517, 1e-05
        %v544 = vadd.f32 %v518, 1e-05
        %v545 = vadd.f32 %v519, 1e-05
        %v546 = vadd.f32 %v520, 1e-05
        %v547 = vadd.f32 %v521, 1e-05
        %v548 = vadd.f32 %v522, 1e-05
        %v549 = vadd.f32 %v523, 1e-05
        %v550 = vadd.f32 %v524, 1e-05
        %v551 = vadd.f32 %v525, 1e-05
        %v552 = vadd.f32 %v526, 1e-05
        %v553 = vadd.f32 %v527, 1e-05
        %v554 = vadd.f32 %v528, 1e-05
        %v555 = vadd.f32 %v529, 1e-05
        %v556 = vadd.f32 %v530, 1e-05
        %v557 = vadd.f32 %v531, 1e-05
        %v558 = vadd.f32 %v532, 1e-05
        %v559 = vadd.f32 %v533, 1e-05
        %v560 = vadd.f32 %v534, 1e-05
        %v561 = vrsqrt.pop %v535
        %v562 = vrsqrt.pop %v536
        %v563 = vrsqrt.pop %v537
        %v564 = vrsqrt.pop %v538
        %v565 = vrsqrt.pop %v539
        %v566 = vrsqrt.pop %v540
        %v567 = vrsqrt.pop %v541
        %v568 = vrsqrt.pop %v542
        %v569 = vrsqrt.pop %v543
        %v570 = vrsqrt.pop %v544
        %v571 = vrsqrt.pop %v545
        %v572 = vrsqrt.pop %v546
        %v573 = vrsqrt.pop %v547
        %v574 = vrsqrt.pop %v548
        %v575 = vrsqrt.pop %v549
        %v576 = vrsqrt.pop %v550
        %v577 = vrsqrt.pop %v551
        %v578 = vrsqrt.pop %v552
        %v579 = vrsqrt.pop %v553
        %v580 = vrsqrt.pop %v554
        %v581 = vrsqrt.pop %v555
        %v582 = vrsqrt.pop %v556
        %v583 = vrsqrt.pop %v557
        %v584 = vrsqrt.pop %v558
        %v585 = vrsqrt.pop %v559
        %v586 = vrsqrt.pop %v560
        %v587 = vmul.f32 %v379, %v561
        %v588 = vmul.f32 %v380, %v562
        %v589 = vmul.f32 %v381, %v563
        %v590 = vmul.f32 %v382, %v564
        %v591 = vmul.f32 %v383, %v565
        %v592 = vmul.f32 %v384, %v566
        %v593 = vmul.f32 %v385, %v567
        %v594 = vmul.f32 %v386, %v568
        %v595 = vmul.f32 %v387, %v569
        %v596 = vmul.f32 %v388, %v570
        %v597 = vmul.f32 %v389, %v571
        %v598 = vmul.f32 %v390, %v572
        %v599 = vmul.f32 %v391, %v573
        %v600 = vmul.f32 %v392, %v574
        %v601 = vmul.f32 %v393, %v575
        %v602 = vmul.f32 %v394, %v576
        %v603 = vmul.f32 %v395, %v577
        %v604 = vmul.f32 %v396, %v578
        %v605 = vmul.f32 %v397, %v579
        %v606 = vmul.f32 %v398, %v580
        %v607 = vmul.f32 %v399, %v581
        %v608 = vmul.f32 %v400, %v582
        %v609 = vmul.f32 %v401, %v583
        %v610 = vmul.f32 %v402, %v584
        %v611 = vmul.f32 %v403, %v585
        %v612 = vmul.f32 %v404, %v586
        %v613 = vlaneseq
        %v614 = vshrl.u32 %v613, 7
        %v615 = vsub.s32 0, %v614
        %v616 = vrot.slane %v273, %v615
        %v617 = vmul.f32 %v587, %v616
        %v618 = vmul.f32 %v588, %v616
        %v619 = vmul.f32 %v589, %v616
        %v620 = vmul.f32 %v590, %v616
        %v621 = vmul.f32 %v591, %v616
        %v622 = vmul.f32 %v592, %v616
        %v623 = vmul.f32 %v593, %v616
        %v624 = vmul.f32 %v594, %v616
        %v625 = vmul.f32 %v595, %v616
        %v626 = vmul.f32 %v596, %v616
        %v627 = vmul.f32 %v597, %v616
        %v628 = vmul.f32 %v598, %v616
        %v629 = vmul.f32 %v599, %v616
        %v630 = vmul.f32 %v600, %v616
        %v631 = vmul.f32 %v601, %v616
        %v632 = vmul.f32 %v602, %v616
        %v633 = vmul.f32 %v603, %v616
        %v634 = vmul.f32 %v604, %v616
        %v635 = vmul.f32 %v605, %v616
        %v636 = vmul.f32 %v606, %v616
        %v637 = vmul.f32 %v607, %v616
        %v638 = vmul.f32 %v608, %v616
        %v639 = vmul.f32 %v609, %v616
        %v640 = vmul.f32 %v610, %v616
        %v641 = vmul.f32 %v611, %v616
        %v642 = vmul.f32 %v612, %v616
        %v643 = vlaneseq
        %v644 = vshrl.u32 %v643, 7
        %v645 = vsub.s32 1, %v644
        %v646 = vrot.slane %v273, %v645
        %v647 = vadd.f32 %v617, %v646
        %v648 = vadd.f32 %v618, %v646
        %v649 = vadd.f32 %v619, %v646
        %v650 = vadd.f32 %v620, %v646
        %v651 = vadd.f32 %v621, %v646
        %v652 = vadd.f32 %v622, %v646
        %v653 = vadd.f32 %v623, %v646
        %v654 = vadd.f32 %v624, %v646
        %v655 = vadd.f32 %v625, %v646
        %v656 = vadd.f32 %v626, %v646
        %v657 = vadd.f32 %v627, %v646
        %v658 = vadd.f32 %v628, %v646
        %v659 = vadd.f32 %v629, %v646
        %v660 = vadd.f32 %v630, %v646
        %v661 = vadd.f32 %v631, %v646
        %v662 = vadd.f32 %v632, %v646
        %v663 = vadd.f32 %v633, %v646
        %v664 = vadd.f32 %v634, %v646
        %v665 = vadd.f32 %v635, %v646
        %v666 = vadd.f32 %v636, %v646
        %v667 = vadd.f32 %v637, %v646
        %v668 = vadd.f32 %v638, %v646
        %v669 = vadd.f32 %v639, %v646
        %v670 = vadd.f32 %v640, %v646
        %v671 = vadd.f32 %v641, %v646
        %v672 = vadd.f32 %v642, %v646
        %v673 = vpack.c.bf16 %v648, %v647
        %v674 = vpack.c.bf16 %v650, %v649
        %v675 = vpack.c.bf16 %v652, %v651
        %v676 = vpack.c.bf16 %v654, %v653
        %v677 = vpack.c.bf16 %v656, %v655
        %v678 = vpack.c.bf16 %v658, %v657
        %v679 = vpack.c.bf16 %v660, %v659
        %v680 = vpack.c.bf16 %v662, %v661
        %v681 = vpack.c.bf16 %v664, %v663
        %v682 = vpack.c.bf16 %v666, %v665
        %v683 = vpack.c.bf16 %v668, %v667
        %v684 = vpack.c.bf16 %v670, %v669
        %v685 = vpack.c.bf16 %v672, %v671
        %v686 = vld [vmem:[%s3] sm:$0xf]
        %v687 = vld [vmem:[%s3 + $0x4] sm:$0xf]
        %v688 = vld [vmem:[%s3 + $0x8] sm:$0xf]
        %v689 = vld [vmem:[%s3 + $0xc] sm:$0xf]
        %v690 = vld [vmem:[%s3 + $0x10] sm:$0xf]
        %v691 = vld [vmem:[%s3 + $0x14] sm:$0xf]
        %v692 = vld [vmem:[%s3 + $0x18] sm:$0xf]
        %v693 = vld [vmem:[%s3 + $0x1c] sm:$0xf]
        %v694 = vld [vmem:[%s2] sm:$0x1]
        %v696 = vlaneseq
        %v697 = vshrl.u32 %v696, 7
        %v698 = vsub.s32 0, %v697
        %v699 = vrot.slane %v694, %v698
        %v709 = vunpack.c.l.b16 %v686
        %v710 = vunpack.c.l.b16 %v687
        %v711 = vunpack.c.l.b16 %v688
        %v712 = vunpack.c.l.b16 %v689
        %v713 = vunpack.c.l.b16 %v690
        %v714 = vunpack.c.l.b16 %v691
        %v715 = vunpack.c.l.b16 %v692
        %v716 = vunpack.c.l.b16 %v693
        %v717 = vpack.c.b16 %v710, %v709
        %v718 = vpack.c.b16 %v712, %v711
        %v719 = vpack.c.b16 %v714, %v713
        %v720 = vpack.c.b16 %v716, %v715
        %v726 = vsel %vm274, %v673, 0
        %v729 = vsel %vm274, %v674, 0
        %v732 = vsel %vm274, %v675, 0
        %v735 = vsel %vm274, %v676, 0
        %v738 = vsel %vm274, %v677, 0
        %v741 = vsel %vm274, %v678, 0
        %v744 = vsel %vm274, %v679, 0
        %v747 = vsel %vm274, %v680, 0
        %v750 = vsel %vm274, %v681, 0
        %v753 = vsel %vm274, %v682, 0
        %v756 = vsel %vm274, %v683, 0
        %v759 = vsel %vm274, %v684, 0
        %v762 = vsel %vm274, %v685, 0
        %764 = vmatprep.subr.bf16.mxu0 0
        %765 = vmatpush1.bf16.msra.mxu0 %v717
        %766 = vmatprep.subr.bf16.mxu0 0
        %767 = vmatpush1.bf16.msra.mxu0 %v718
        %768 = vmatprep.subr.bf16.mxu0 0
        %769 = vmatpush1.bf16.msra.mxu0 %v719
        %770 = vmatprep.subr.bf16.mxu0 0
        %771 = vmatpush1.bf16.msra.mxu0 %v720
        %772 = vmatprep.subr.bf16.mxu0 0
        %773 = vmatpush1.bf16.msra.mxu0 0
        %774 = vmatprep.subr.bf16.mxu0 0
        %775 = vmatpush1.bf16.msra.mxu0 0
        %776 = vmatprep.subr.bf16.mxu0 0
        %777 = vmatpush1.bf16.msra.mxu0 0
        %778 = vmatprep.subr.bf16.mxu0 0
        %779 = vmatpush1.bf16.msra.mxu0 0
        %780 = vmatprep.subr.bf16.mxu0 0
        %781 = vmatpush1.bf16.msra.mxu0 0
        %782 = vmatprep.subr.bf16.mxu0 0
        %783 = vmatpush1.bf16.msra.mxu0 0
        %784 = vmatprep.subr.bf16.mxu0 0
        %785 = vmatpush1.bf16.msra.mxu0 0
        %786 = vmatprep.subr.bf16.mxu0 0
        %787 = vmatpush1.bf16.msra.mxu0 0
        %788 = vmatprep.subr.bf16.mxu0 0
        %789 = vmatpush1.bf16.msra.mxu0 0
        %790 = vmatprep.subr.bf16.mxu0 0
        %791 = vmatpush1.bf16.msra.mxu0 0
        %792 = vmatprep.subr.bf16.mxu0 0
        %793 = vmatpush1.bf16.msra.mxu0 0
        %794 = vmatprep.subr.bf16.mxu0 0
        %795 = vmatpush1.bf16.msra.mxu0 0
        %796 = vmatprep.mubr.bf16.mxu0 0
        %797 = vmatmul.mubr.bf16.gmra.mrb[0].mxu0 %v726
        %v798 = vpop.f32.mrb[0].mxu0
        %v799 = vadd.f32 %v699, %v798
        %v800 = vpop.f32.mrb[0].mxu0
        %v801 = vpop.f32.mrb[0].mxu0
        %v802 = vadd.f32 %v699, %v801
        %v803 = vpop.f32.mrb[0].mxu0
        %804 = vmatprep.mubr.bf16.mxu0 0
        %805 = vmatmul.mubr.bf16.gmra.mrb[0].mxu0 %v729
        %v806 = vpop.f32.mrb[0].mxu0
        %v807 = vadd.f32 %v699, %v806
        %v808 = vpop.f32.mrb[0].mxu0
        %v809 = vpop.f32.mrb[0].mxu0
        %v810 = vadd.f32 %v699, %v809
        %v811 = vpop.f32.mrb[0].mxu0
        %812 = vmatprep.mubr.bf16.mxu0 0
        %813 = vmatmul.mubr.bf16.gmra.mrb[0].mxu0 %v732
        %v814 = vpop.f32.mrb[0].mxu0
        %v815 = vadd.f32 %v699, %v814
        %v816 = vpop.f32.mrb[0].mxu0
        %v817 = vpop.f32.mrb[0].mxu0
        %v818 = vadd.f32 %v699, %v817
        %v819 = vpop.f32.mrb[0].mxu0
        %820 = vmatprep.mubr.bf16.mxu0 0
        %821 = vmatmul.mubr.bf16.gmra.mrb[0].mxu0 %v735
        %v822 = vpop.f32.mrb[0].mxu0
        %v823 = vadd.f32 %v699, %v822
        %v824 = vpop.f32.mrb[0].mxu0
        %v825 = vpop.f32.mrb[0].mxu0
        %v826 = vadd.f32 %v699, %v825
        %v827 = vpop.f32.mrb[0].mxu0
        %828 = vmatprep.mubr.bf16.mxu0 0
        %829 = vmatmul.mubr.bf16.gmra.mrb[0].mxu0 %v738
        %v830 = vpop.f32.mrb[0].mxu0
        %v831 = vadd.f32 %v699, %v830
        %v832 = vpop.f32.mrb[0].mxu0
        %v833 = vpop.f32.mrb[0].mxu0
        %v834 = vadd.f32 %v699, %v833
        %v835 = vpop.f32.mrb[0].mxu0
        %836 = vmatprep.mubr.bf16.mxu0 0
        %837 = vmatmul.mubr.bf16.gmra.mrb[0].mxu0 %v741
        %v838 = vpop.f32.mrb[0].mxu0
        %v839 = vadd.f32 %v699, %v838
        %v840 = vpop.f32.mrb[0].mxu0
        %v841 = vpop.f32.mrb[0].mxu0
        %v842 = vadd.f32 %v699, %v841
        %v843 = vpop.f32.mrb[0].mxu0
        %844 = vmatprep.mubr.bf16.mxu0 0
        %845 = vmatmul.mubr.bf16.gmra.mrb[0].mxu0 %v744
        %v846 = vpop.f32.mrb[0].mxu0
        %v847 = vadd.f32 %v699, %v846
        %v848 = vpop.f32.mrb[0].mxu0
        %v849 = vpop.f32.mrb[0].mxu0
        %v850 = vadd.f32 %v699, %v849
        %v851 = vpop.f32.mrb[0].mxu0
        %852 = vmatprep.mubr.bf16.mxu0 0
        %853 = vmatmul.mubr.bf16.gmra.mrb[0].mxu0 %v747
        %v854 = vpop.f32.mrb[0].mxu0
        %v855 = vadd.f32 %v699, %v854
        %v856 = vpop.f32.mrb[0].mxu0
        %v857 = vpop.f32.mrb[0].mxu0
        %v858 = vadd.f32 %v699, %v857
        %v859 = vpop.f32.mrb[0].mxu0
        %860 = vmatprep.mubr.bf16.mxu0 0
        %861 = vmatmul.mubr.bf16.gmra.mrb[0].mxu0 %v750
        %v862 = vpop.f32.mrb[0].mxu0
        %v863 = vadd.f32 %v699, %v862
        %v864 = vpop.f32.mrb[0].mxu0
        %v865 = vpop.f32.mrb[0].mxu0
        %v866 = vadd.f32 %v699, %v865
        %v867 = vpop.f32.mrb[0].mxu0
        %868 = vmatprep.mubr.bf16.mxu0 0
        %869 = vmatmul.mubr.bf16.gmra.mrb[0].mxu0 %v753
        %v870 = vpop.f32.mrb[0].mxu0
        %v871 = vadd.f32 %v699, %v870
        %v872 = vpop.f32.mrb[0].mxu0
        %v873 = vpop.f32.mrb[0].mxu0
        %v874 = vadd.f32 %v699, %v873
        %v875 = vpop.f32.mrb[0].mxu0
        %876 = vmatprep.mubr.bf16.mxu0 0
        %877 = vmatmul.mubr.bf16.gmra.mrb[0].mxu0 %v756
        %v878 = vpop.f32.mrb[0].mxu0
        %v879 = vadd.f32 %v699, %v878
        %v880 = vpop.f32.mrb[0].mxu0
        %v881 = vpop.f32.mrb[0].mxu0
        %v882 = vadd.f32 %v699, %v881
        %v883 = vpop.f32.mrb[0].mxu0
        %884 = vmatprep.mubr.bf16.mxu0 0
        %885 = vmatmul.mubr.bf16.gmra.mrb[0].mxu0 %v759
        %v886 = vpop.f32.mrb[0].mxu0
        %v887 = vadd.f32 %v699, %v886
        %v888 = vpop.f32.mrb[0].mxu0
        %v889 = vpop.f32.mrb[0].mxu0
        %v890 = vadd.f32 %v699, %v889
        %v891 = vpop.f32.mrb[0].mxu0
        %892 = vmatprep.mubr.bf16.mxu0 0
        %893 = vmatmul.mubr.bf16.gmra.mrb[0].mxu0 %v762
        %v894 = vpop.f32.mrb[0].mxu0
        %v895 = vadd.f32 %v699, %v894
        %v896 = vpop.f32.mrb[0].mxu0
        %v897 = vpop.f32.mrb[0].mxu0
        %v898 = vadd.f32 %v699, %v897
        %v899 = vpop.f32.mrb[0].mxu0
        %900 = vdwg.mxu0
        %v901 = vmax.f32 %v799, 0.0
        %v902 = vmax.f32 %v802, 0.0
        %v903 = vmax.f32 %v807, 0.0
        %v904 = vmax.f32 %v810, 0.0
        %v905 = vmax.f32 %v815, 0.0
        %v906 = vmax.f32 %v818, 0.0
        %v907 = vmax.f32 %v823, 0.0
        %v908 = vmax.f32 %v826, 0.0
        %v909 = vmax.f32 %v831, 0.0
        %v910 = vmax.f32 %v834, 0.0
        %v911 = vmax.f32 %v839, 0.0
        %v912 = vmax.f32 %v842, 0.0
        %v913 = vmax.f32 %v847, 0.0
        %v914 = vmax.f32 %v850, 0.0
        %v915 = vmax.f32 %v855, 0.0
        %v916 = vmax.f32 %v858, 0.0
        %v917 = vmax.f32 %v863, 0.0
        %v918 = vmax.f32 %v866, 0.0
        %v919 = vmax.f32 %v871, 0.0
        %v920 = vmax.f32 %v874, 0.0
        %v921 = vmax.f32 %v879, 0.0
        %v922 = vmax.f32 %v882, 0.0
        %v923 = vmax.f32 %v887, 0.0
        %v924 = vmax.f32 %v890, 0.0
        %v925 = vmax.f32 %v895, 0.0
        %v926 = vmax.f32 %v898, 0.0
        %v927 = vpack.c.bf16 %v902, %v901
        %v928 = vpack.c.bf16 %v904, %v903
        %v929 = vpack.c.bf16 %v906, %v905
        %v930 = vpack.c.bf16 %v908, %v907
        %v931 = vpack.c.bf16 %v910, %v909
        %v932 = vpack.c.bf16 %v912, %v911
        %v933 = vpack.c.bf16 %v914, %v913
        %v934 = vpack.c.bf16 %v916, %v915
        %v935 = vpack.c.bf16 %v918, %v917
        %v936 = vpack.c.bf16 %v920, %v919
        %v937 = vpack.c.bf16 %v922, %v921
        %v938 = vpack.c.bf16 %v924, %v923
        %v939 = vpack.c.bf16 %v926, %v925
        %v940 = vld [vmem:[%s4] sm:$0xf]
        %v941 = vld [vmem:[%s4 + $0x4] sm:$0xf]
        %v942 = vld [vmem:[%s4 + $0x8] sm:$0xf]
        %v943 = vld [vmem:[%s4 + $0xc] sm:$0xf]
        %v944 = vld [vmem:[%s4 + $0x10] sm:$0xf]
        %v945 = vld [vmem:[%s4 + $0x14] sm:$0xf]
        %v946 = vld [vmem:[%s4 + $0x18] sm:$0xf]
        %v947 = vld [vmem:[%s4 + $0x1c] sm:$0xf]
        %v948 = vld [vmem:[%s4 + $0x20] sm:$0xf]
        %v949 = vld [vmem:[%s4 + $0x24] sm:$0xf]
        %v950 = vld [vmem:[%s4 + $0x28] sm:$0xf]
        %v951 = vld [vmem:[%s4 + $0x2c] sm:$0xf]
        %v952 = vld [vmem:[%s4 + $0x30] sm:$0xf]
        %v953 = vld [vmem:[%s4 + $0x34] sm:$0xf]
        %v954 = vld [vmem:[%s4 + $0x38] sm:$0xf]
        %v955 = vld [vmem:[%s4 + $0x3c] sm:$0xf]
        %v956 = vlaneseq
        %v957 = vshrl.u32 %v956, 7
        %v958 = vsub.s32 2, %v957
        %v959 = vrot.slane %v273, %v958
        %v976 = vunpack.c.l.b16 %v940
        %v977 = vunpack.c.l.b16 %v941
        %v978 = vunpack.c.l.b16 %v942
        %v979 = vunpack.c.l.b16 %v943
        %v980 = vunpack.c.l.b16 %v944
        %v981 = vunpack.c.l.b16 %v945
        %v982 = vunpack.c.l.b16 %v946
        %v983 = vunpack.c.l.b16 %v947
        %v984 = vunpack.c.l.b16 %v948
        %v985 = vunpack.c.l.b16 %v949
        %v986 = vunpack.c.l.b16 %v950
        %v987 = vunpack.c.l.b16 %v951
        %v988 = vunpack.c.l.b16 %v952
        %v989 = vunpack.c.l.b16 %v953
        %v990 = vunpack.c.l.b16 %v954
        %v991 = vunpack.c.l.b16 %v955
        %v992 = vpack.c.b16 %v977, %v976
        %v993 = vpack.c.b16 %v979, %v978
        %v994 = vpack.c.b16 %v981, %v980
        %v995 = vpack.c.b16 %v983, %v982
        %v996 = vpack.c.b16 %v985, %v984
        %v997 = vpack.c.b16 %v987, %v986
        %v998 = vpack.c.b16 %v989, %v988
        %v999 = vpack.c.b16 %v991, %v990
        %1008 = vmatprep.subr.bf16.mxu0 0
        %1009 = vmatpush1.bf16.msra.mxu0 %v992
        %1010 = vmatprep.subr.bf16.mxu0 0
        %1011 = vmatpush1.bf16.msra.mxu0 %v993
        %1012 = vmatprep.subr.bf16.mxu0 0
        %1013 = vmatpush1.bf16.msra.mxu0 %v994
        %1014 = vmatprep.subr.bf16.mxu0 0
        %1015 = vmatpush1.bf16.msra.mxu0 %v995
        %1016 = vmatprep.subr.bf16.mxu0 0
        %1017 = vmatpush1.bf16.msra.mxu0 %v996
        %1018 = vmatprep.subr.bf16.mxu0 0
        %1019 = vmatpush1.bf16.msra.mxu0 %v997
        %1020 = vmatprep.subr.bf16.mxu0 0
        %1021 = vmatpush1.bf16.msra.mxu0 %v998
        %1022 = vmatprep.subr.bf16.mxu0 0
        %1023 = vmatpush1.bf16.msra.mxu0 %v999
        %1024 = vmatprep.subr.bf16.mxu0 0
        %1025 = vmatpush1.bf16.msra.mxu0 0
        %1026 = vmatprep.subr.bf16.mxu0 0
        %1027 = vmatpush1.bf16.msra.mxu0 0
        %1028 = vmatprep.subr.bf16.mxu0 0
        %1029 = vmatpush1.bf16.msra.mxu0 0
        %1030 = vmatprep.subr.bf16.mxu0 0
        %1031 = vmatpush1.bf16.msra.mxu0 0
        %1032 = vmatprep.subr.bf16.mxu0 0
        %1033 = vmatpush1.bf16.msra.mxu0 0
        %1034 = vmatprep.subr.bf16.mxu0 0
        %1035 = vmatpush1.bf16.msra.mxu0 0
        %1036 = vmatprep.subr.bf16.mxu0 0
        %1037 = vmatpush1.bf16.msra.mxu0 0
        %1038 = vmatprep.subr.bf16.mxu0 0
        %1039 = vmatpush1.bf16.msra.mxu0 0
        %1040 = vmatprep.mubr.bf16.mxu0 0
        %1041 = vmatmul.mubr.bf16.gmra.mrb[0].mxu0 %v927
        %v1042 = vpop.f32.mrb[0].mxu0
        %v1043 = vadd.f32 %v959, %v1042
        %v1044 = vpop.f32.mrb[0].mxu0
        %v1045 = vpop.f32.mrb[0].mxu0
        %v1046 = vadd.f32 %v959, %v1045
        %v1047 = vpop.f32.mrb[0].mxu0
        %1048 = vmatprep.mubr.bf16.mxu0 0
        %1049 = vmatmul.mubr.bf16.gmra.mrb[0].mxu0 %v928
        %v1050 = vpop.f32.mrb[0].mxu0
        %v1051 = vadd.f32 %v959, %v1050
        %v1052 = vpop.f32.mrb[0].mxu0
        %v1053 = vpop.f32.mrb[0].mxu0
        %v1054 = vadd.f32 %v959, %v1053
        %v1055 = vpop.f32.mrb[0].mxu0
        %1056 = vmatprep.mubr.bf16.mxu0 0
        %1057 = vmatmul.mubr.bf16.gmra.mrb[0].mxu0 %v929
        %v1058 = vpop.f32.mrb[0].mxu0
        %v1059 = vadd.f32 %v959, %v1058
        %v1060 = vpop.f32.mrb[0].mxu0
        %v1061 = vpop.f32.mrb[0].mxu0
        %v1062 = vadd.f32 %v959, %v1061
        %v1063 = vpop.f32.mrb[0].mxu0
        %1064 = vmatprep.mubr.bf16.mxu0 0
        %1065 = vmatmul.mubr.bf16.gmra.mrb[0].mxu0 %v930
        %v1066 = vpop.f32.mrb[0].mxu0
        %v1067 = vadd.f32 %v959, %v1066
        %v1068 = vpop.f32.mrb[0].mxu0
        %v1069 = vpop.f32.mrb[0].mxu0
        %v1070 = vadd.f32 %v959, %v1069
        %v1071 = vpop.f32.mrb[0].mxu0
        %1072 = vmatprep.mubr.bf16.mxu0 0
        %1073 = vmatmul.mubr.bf16.gmra.mrb[0].mxu0 %v931
        %v1074 = vpop.f32.mrb[0].mxu0
        %v1075 = vadd.f32 %v959, %v1074
        %v1076 = vpop.f32.mrb[0].mxu0
        %v1077 = vpop.f32.mrb[0].mxu0
        %v1078 = vadd.f32 %v959, %v1077
        %v1079 = vpop.f32.mrb[0].mxu0
        %1080 = vmatprep.mubr.bf16.mxu0 0
        %1081 = vmatmul.mubr.bf16.gmra.mrb[0].mxu0 %v932
        %v1082 = vpop.f32.mrb[0].mxu0
        %v1083 = vadd.f32 %v959, %v1082
        %v1084 = vpop.f32.mrb[0].mxu0
        %v1085 = vpop.f32.mrb[0].mxu0
        %v1086 = vadd.f32 %v959, %v1085
        %v1087 = vpop.f32.mrb[0].mxu0
        %1088 = vmatprep.mubr.bf16.mxu0 0
        %1089 = vmatmul.mubr.bf16.gmra.mrb[0].mxu0 %v933
        %v1090 = vpop.f32.mrb[0].mxu0
        %v1091 = vadd.f32 %v959, %v1090
        %v1092 = vpop.f32.mrb[0].mxu0
        %v1093 = vpop.f32.mrb[0].mxu0
        %v1094 = vadd.f32 %v959, %v1093
        %v1095 = vpop.f32.mrb[0].mxu0
        %1096 = vmatprep.mubr.bf16.mxu0 0
        %1097 = vmatmul.mubr.bf16.gmra.mrb[0].mxu0 %v934
        %v1098 = vpop.f32.mrb[0].mxu0
        %v1099 = vadd.f32 %v959, %v1098
        %v1100 = vpop.f32.mrb[0].mxu0
        %v1101 = vpop.f32.mrb[0].mxu0
        %v1102 = vadd.f32 %v959, %v1101
        %v1103 = vpop.f32.mrb[0].mxu0
        %1104 = vmatprep.mubr.bf16.mxu0 0
        %1105 = vmatmul.mubr.bf16.gmra.mrb[0].mxu0 %v935
        %v1106 = vpop.f32.mrb[0].mxu0
        %v1107 = vadd.f32 %v959, %v1106
        %v1108 = vpop.f32.mrb[0].mxu0
        %v1109 = vpop.f32.mrb[0].mxu0
        %v1110 = vadd.f32 %v959, %v1109
        %v1111 = vpop.f32.mrb[0].mxu0
        %1112 = vmatprep.mubr.bf16.mxu0 0
        %1113 = vmatmul.mubr.bf16.gmra.mrb[0].mxu0 %v936
        %v1114 = vpop.f32.mrb[0].mxu0
        %v1115 = vadd.f32 %v959, %v1114
        %v1116 = vpop.f32.mrb[0].mxu0
        %v1117 = vpop.f32.mrb[0].mxu0
        %v1118 = vadd.f32 %v959, %v1117
        %v1119 = vpop.f32.mrb[0].mxu0
        %1120 = vmatprep.mubr.bf16.mxu0 0
        %1121 = vmatmul.mubr.bf16.gmra.mrb[0].mxu0 %v937
        %v1122 = vpop.f32.mrb[0].mxu0
        %v1123 = vadd.f32 %v959, %v1122
        %v1124 = vpop.f32.mrb[0].mxu0
        %v1125 = vpop.f32.mrb[0].mxu0
        %v1126 = vadd.f32 %v959, %v1125
        %v1127 = vpop.f32.mrb[0].mxu0
        %1128 = vmatprep.mubr.bf16.mxu0 0
        %1129 = vmatmul.mubr.bf16.gmra.mrb[0].mxu0 %v938
        %v1130 = vpop.f32.mrb[0].mxu0
        %v1131 = vadd.f32 %v959, %v1130
        %v1132 = vpop.f32.mrb[0].mxu0
        %v1133 = vpop.f32.mrb[0].mxu0
        %v1134 = vadd.f32 %v959, %v1133
        %v1135 = vpop.f32.mrb[0].mxu0
        %1136 = vmatprep.mubr.bf16.mxu0 0
        %1137 = vmatmul.mubr.bf16.gmra.mrb[0].mxu0 %v939
        %v1138 = vpop.f32.mrb[0].mxu0
        %v1139 = vadd.f32 %v959, %v1138
        %v1140 = vpop.f32.mrb[0].mxu0
        %v1141 = vpop.f32.mrb[0].mxu0
        %v1142 = vadd.f32 %v959, %v1141
        %v1143 = vpop.f32.mrb[0].mxu0
        %1144 = vdwg.mxu0
        %v1145 = vlaneseq
        %v1146 = vshrl.u32 %v1145, 7
        %v1147 = vsub.s32 3, %v1146
        %v1148 = vrot.slane %v273, %v1147
        %v1149 = vmul.f32 %v1043, %v1148
        %v1150 = vmul.f32 %v1046, %v1148
        %v1151 = vmul.f32 %v1051, %v1148
        %v1152 = vmul.f32 %v1054, %v1148
        %v1153 = vmul.f32 %v1059, %v1148
        %v1154 = vmul.f32 %v1062, %v1148
        %v1155 = vmul.f32 %v1067, %v1148
        %v1156 = vmul.f32 %v1070, %v1148
        %v1157 = vmul.f32 %v1075, %v1148
        %v1158 = vmul.f32 %v1078, %v1148
        %v1159 = vmul.f32 %v1083, %v1148
        %v1160 = vmul.f32 %v1086, %v1148
        %v1161 = vmul.f32 %v1091, %v1148
        %v1162 = vmul.f32 %v1094, %v1148
        %v1163 = vmul.f32 %v1099, %v1148
        %v1164 = vmul.f32 %v1102, %v1148
        %v1165 = vmul.f32 %v1107, %v1148
        %v1166 = vmul.f32 %v1110, %v1148
        %v1167 = vmul.f32 %v1115, %v1148
        %v1168 = vmul.f32 %v1118, %v1148
        %v1169 = vmul.f32 %v1123, %v1148
        %v1170 = vmul.f32 %v1126, %v1148
        %v1171 = vmul.f32 %v1131, %v1148
        %v1172 = vmul.f32 %v1134, %v1148
        %v1173 = vmul.f32 %v1139, %v1148
        %v1174 = vmul.f32 %v1142, %v1148
        %v1175 = vadd.f32 %v247, %v1149
        %v1176 = vadd.f32 %v248, %v1150
        %v1177 = vadd.f32 %v249, %v1151
        %v1178 = vadd.f32 %v250, %v1152
        %v1179 = vadd.f32 %v251, %v1153
        %v1180 = vadd.f32 %v252, %v1154
        %v1181 = vadd.f32 %v253, %v1155
        %v1182 = vadd.f32 %v254, %v1156
        %v1183 = vadd.f32 %v255, %v1157
        %v1184 = vadd.f32 %v256, %v1158
        %v1185 = vadd.f32 %v257, %v1159
        %v1186 = vadd.f32 %v258, %v1160
        %v1187 = vadd.f32 %v259, %v1161
        %v1188 = vadd.f32 %v260, %v1162
        %v1189 = vadd.f32 %v261, %v1163
        %v1190 = vadd.f32 %v262, %v1164
        %v1191 = vadd.f32 %v263, %v1165
        %v1192 = vadd.f32 %v264, %v1166
        %v1193 = vadd.f32 %v265, %v1167
        %v1194 = vadd.f32 %v266, %v1168
        %v1195 = vadd.f32 %v267, %v1169
        %v1196 = vadd.f32 %v268, %v1170
        %v1197 = vadd.f32 %v269, %v1171
        %v1198 = vadd.f32 %v270, %v1172
        %v1199 = vadd.f32 %v271, %v1173
        %v1200 = vadd.f32 %v272, %v1174
        %1201 = vst.msk [vmem:[%s226] sm:$0xff] %vm274, %v1175
        %1202 = vst.msk [vmem:[%s226 + $0x8] sm:$0xff] %vm274, %v1176
        %1203 = vst.msk [vmem:[%s226 + $0x10] sm:$0xff] %vm274, %v1177
        %1204 = vst.msk [vmem:[%s226 + $0x18] sm:$0xff] %vm274, %v1178
        %1205 = vst.msk [vmem:[%s226 + $0x20] sm:$0xff] %vm274, %v1179
        %1206 = vst.msk [vmem:[%s226 + $0x28] sm:$0xff] %vm274, %v1180
        %1207 = vst.msk [vmem:[%s226 + $0x30] sm:$0xff] %vm274, %v1181
        %1208 = vst.msk [vmem:[%s226 + $0x38] sm:$0xff] %vm274, %v1182
        %1209 = vst.msk [vmem:[%s226 + $0x40] sm:$0xff] %vm274, %v1183
        %1210 = vst.msk [vmem:[%s226 + $0x48] sm:$0xff] %vm274, %v1184
        %1211 = vst.msk [vmem:[%s226 + $0x50] sm:$0xff] %vm274, %v1185
        %1212 = vst.msk [vmem:[%s226 + $0x58] sm:$0xff] %vm274, %v1186
        %1213 = vst.msk [vmem:[%s226 + $0x60] sm:$0xff] %vm274, %v1187
        %1214 = vst.msk [vmem:[%s226 + $0x68] sm:$0xff] %vm274, %v1188
        %1215 = vst.msk [vmem:[%s226 + $0x70] sm:$0xff] %vm274, %v1189
        %1216 = vst.msk [vmem:[%s226 + $0x78] sm:$0xff] %vm274, %v1190
        %1217 = vst.msk [vmem:[%s226 + $0x80] sm:$0xff] %vm274, %v1191
        %1218 = vst.msk [vmem:[%s226 + $0x88] sm:$0xff] %vm274, %v1192
        %1219 = vst.msk [vmem:[%s226 + $0x90] sm:$0xff] %vm274, %v1193
        %1220 = vst.msk [vmem:[%s226 + $0x98] sm:$0xff] %vm274, %v1194
        %1221 = vst.msk [vmem:[%s226 + $0xa0] sm:$0xff] %vm274, %v1195
        %1222 = vst.msk [vmem:[%s226 + $0xa8] sm:$0xff] %vm274, %v1196
        %1223 = vst.msk [vmem:[%s226 + $0xb0] sm:$0xff] %vm274, %v1197
        %1224 = vst.msk [vmem:[%s226 + $0xb8] sm:$0xff] %vm274, %v1198
        %1225 = vst.msk [vmem:[%s226 + $0xc0] sm:$0xff] %vm274, %v1199
        %1226 = vst.msk [vmem:[%s226 + $0xc8] sm:$0xff] %vm274, %v1200
        %s1227 = sand.u32 %s134, 1
        %s1228 = sand.u32 %s134, 1
        %s1229 = smul.addr %s1228, 208
        %s1230 = scalar_lea.vmem [#allocation2], %s1229
        // Predicated region
        $region41: #{dense_residual_apply.1} parent=39 // pred_check
          %p1231 = pneg %p144
        $region42: #{dense_residual_apply.1} parent=39 // pred_check_branch
          %1233 = sbr.rel (%p1231) target = $region44
        $region43: #{dense_residual_apply.1} parent=39 // pred_region
          %s1234 = smul.u32 26, %s16
          %s1235 = ssub.s32 51, %s1234
          %p1236 = scmp.lt.s32.totalorder %s1235, 26
          %s1237 = scalar_select %p1236, %s1235, 26
          %s1238 = smul.u32 128, %s1237
          %p1239 = scmp.ne.s32.totalorder 0, %s1238
          %s1240 = smul.addr %s1234, 8
          %s1241 = scalar_lea.vmem %s5, %s1240
          // Predicated region
          $region45: #{dense_residual_apply.1} parent=43 // pred_check
            %p1242 = pneg %p1239
          $region46: #{dense_residual_apply.1} parent=43 // pred_check_branch
            %1244 = sbr.rel (%p1242) target = $region48
          $region47: #{dense_residual_apply.1} parent=43 // pred_region
            // Predicated region
            $region49: #{dense_residual_apply.1} parent=47 // pred_check
              _
            $region50: #{dense_residual_apply.1} parent=47 // pred_check_branch
              %1246 = sbr.rel (0) target = $region52
            $region51: #{dense_residual_apply.1} parent=47 // pred_region
              // Predicated region
              $region71: #{dense_residual_apply.1} parent=51 // pred_check
                _
              $region72: #{dense_residual_apply.1} parent=51 // pred_check_branch
                %1346 = sbr.rel (0) target = $region74
              $region73: #{dense_residual_apply.1} parent=51 // pred_region
                %s1347 = sdiv.u32.pop %s1237, 26
                %s1348 = srem.u32.pop %s1237, 26
                // While loop
                $region75: #{dense_residual_apply.1} parent=73 // loop_pre_header
                  _
                $region76: #{dense_residual_apply.1} parent=73 // loop_header
                  %s1350 = sphi 0, %s1352
                  %p1351 = scmp.ge.s32.totalorder %s1350, %s1347
                  %s1355 = sphi 0, %s1412
                  %s1356 = sphi %s1230, %s1415
                  %s1357 = sphi %s1241, %s1416
                $region77: #{dense_residual_apply.1} parent=73 // loop_header_branch
                  %1354 = sbr.rel (%p1351) target = $region81
                $region78: #{dense_residual_apply.1} parent=73 // loop_body
                  %v1358 = vld [vmem:[%s1356] sm:$0xff]
                  %1359 = vst [vmem:[%s1357] sm:$0xff] %v1358
                  %v1360 = vld [vmem:[%s1356 + $0x8] sm:$0xff]
                  %1361 = vst [vmem:[%s1357 + $0x8] sm:$0xff] %v1360
                  %v1362 = vld [vmem:[%s1356 + $0x10] sm:$0xff]
                  %1363 = vst [vmem:[%s1357 + $0x10] sm:$0xff] %v1362
                  %v1364 = vld [vmem:[%s1356 + $0x18] sm:$0xff]
                  %1365 = vst [vmem:[%s1357 + $0x18] sm:$0xff] %v1364
                  %v1366 = vld [vmem:[%s1356 + $0x20] sm:$0xff]
                  %1367 = vst [vmem:[%s1357 + $0x20] sm:$0xff] %v1366
                  %v1368 = vld [vmem:[%s1356 + $0x28] sm:$0xff]
                  %1369 = vst [vmem:[%s1357 + $0x28] sm:$0xff] %v1368
                  %v1370 = vld [vmem:[%s1356 + $0x30] sm:$0xff]
                  %1371 = vst [vmem:[%s1357 + $0x30] sm:$0xff] %v1370
                  %v1372 = vld [vmem:[%s1356 + $0x38] sm:$0xff]
                  %1373 = vst [vmem:[%s1357 + $0x38] sm:$0xff] %v1372
                  %v1374 = vld [vmem:[%s1356 + $0x40] sm:$0xff]
                  %1375 = vst [vmem:[%s1357 + $0x40] sm:$0xff] %v1374
                  %v1376 = vld [vmem:[%s1356 + $0x48] sm:$0xff]
                  %1377 = vst [vmem:[%s1357 + $0x48] sm:$0xff] %v1376
                  %v1378 = vld [vmem:[%s1356 + $0x50] sm:$0xff]
                  %1379 = vst [vmem:[%s1357 + $0x50] sm:$0xff] %v1378
                  %v1380 = vld [vmem:[%s1356 + $0x58] sm:$0xff]
                  %1381 = vst [vmem:[%s1357 + $0x58] sm:$0xff] %v1380
                  %v1382 = vld [vmem:[%s1356 + $0x60] sm:$0xff]
                  %1383 = vst [vmem:[%s1357 + $0x60] sm:$0xff] %v1382
                  %v1384 = vld [vmem:[%s1356 + $0x68] sm:$0xff]
                  %1385 = vst [vmem:[%s1357 + $0x68] sm:$0xff] %v1384
                  %v1386 = vld [vmem:[%s1356 + $0x70] sm:$0xff]
                  %1387 = vst [vmem:[%s1357 + $0x70] sm:$0xff] %v1386
                  %v1388 = vld [vmem:[%s1356 + $0x78] sm:$0xff]
                  %1389 = vst [vmem:[%s1357 + $0x78] sm:$0xff] %v1388
                  %v1390 = vld [vmem:[%s1356 + $0x80] sm:$0xff]
                  %1391 = vst [vmem:[%s1357 + $0x80] sm:$0xff] %v1390
                  %v1392 = vld [vmem:[%s1356 + $0x88] sm:$0xff]
                  %1393 = vst [vmem:[%s1357 + $0x88] sm:$0xff] %v1392
                  %v1394 = vld [vmem:[%s1356 + $0x90] sm:$0xff]
                  %1395 = vst [vmem:[%s1357 + $0x90] sm:$0xff] %v1394
                  %v1396 = vld [vmem:[%s1356 + $0x98] sm:$0xff]
                  %1397 = vst [vmem:[%s1357 + $0x98] sm:$0xff] %v1396
                  %v1398 = vld [vmem:[%s1356 + $0xa0] sm:$0xff]
                  %1399 = vst [vmem:[%s1357 + $0xa0] sm:$0xff] %v1398
                  %v1400 = vld [vmem:[%s1356 + $0xa8] sm:$0xff]
                  %1401 = vst [vmem:[%s1357 + $0xa8] sm:$0xff] %v1400
                  %v1402 = vld [vmem:[%s1356 + $0xb0] sm:$0xff]
                  %1403 = vst [vmem:[%s1357 + $0xb0] sm:$0xff] %v1402
                  %v1404 = vld [vmem:[%s1356 + $0xb8] sm:$0xff]
                  %1405 = vst [vmem:[%s1357 + $0xb8] sm:$0xff] %v1404
                  %v1406 = vld [vmem:[%s1356 + $0xc0] sm:$0xff]
                  %1407 = vst [vmem:[%s1357 + $0xc0] sm:$0xff] %v1406
                  %v1408 = vld [vmem:[%s1356 + $0xc8] sm:$0xff]
                  %1409 = vst [vmem:[%s1357 + $0xc8] sm:$0xff] %v1408
                  %s1410 = sadd.s32 1, %s1355
                  %p1411 = scmp.ge.s32.totalorder %s1410, %s1347
                  %s1412 = scalar_select %p1411, 0, %s1410
                  %s1413 = smul.u32 %s1412, 208
                  %s1414 = smul.u32 %s1412, 208
                  %s1415 = scalar_lea.vmem %s1230, %s1413 [#allocation2]
                  %s1416 = scalar_lea.vmem %s1241, %s1414
                $region79: #{dense_residual_apply.1} parent=73 // loop_footer
                  %s1352 = sadd.s32 %s1350, 1
                $region80: #{dense_residual_apply.1} parent=73 // loop_footer_branch
                  %1349 = sbr.rel target = $region76
                $region81: #{dense_residual_apply.1} parent=73 // loop_exit
                  _
                %s1417 = sdiv.u32.pop %s1237, 26
                %s1418 = srem.u32.pop %s1237, 26
                %s1419 = smul.u32 %s1417, 26
                %s1420 = smul.u32 8, %s1419
                %s1421 = scalar_lea.vmem %s1230, %s1420 [#allocation2]
                %s1422 = smul.u32 8, %s1419
                %s1423 = scalar_lea.vmem %s1241, %s1422
                // While loop
                $region82: #{dense_residual_apply.1} parent=73 // loop_pre_header
                  _
                $region83: #{dense_residual_apply.1} parent=73 // loop_header
                  %s1425 = sphi 0, %s1427
                  %p1426 = scmp.ge.s32.totalorder %s1425, %s1418
                  %s1430 = sphi 0, %s1437
                  %s1431 = sphi %s1421, %s1440
                  %s1432 = sphi %s1423, %s1441
                $region84: #{dense_residual_apply.1} parent=73 // loop_header_branch
                  %1429 = sbr.rel (%p1426) target = $region88
                $region85: #{dense_residual_apply.1} parent=73 // loop_body
                  %v1433 = vld [vmem:[%s1431] sm:$0xff]
                  %1434 = vst [vmem:[%s1432] sm:$0xff] %v1433
                  %s1435 = sadd.s32 1, %s1430
                  %p1436 = scmp.ge.s32.totalorder %s1435, %s1418
                  %s1437 = scalar_select %p1436, 0, %s1435
                  %s1438 = smul.u32 %s1437, 8
                  %s1439 = smul.u32 %s1437, 8
                  %s1440 = scalar_lea.vmem %s1421, %s1438 [#allocation2]
                  %s1441 = scalar_lea.vmem %s1423, %s1439
                $region86: #{dense_residual_apply.1} parent=73 // loop_footer
                  %s1427 = sadd.s32 %s1425, 1
                $region87: #{dense_residual_apply.1} parent=73 // loop_footer_branch
                  %1424 = sbr.rel target = $region83
                $region88: #{dense_residual_apply.1} parent=73 // loop_exit
                  _
              $region74: #{dense_residual_apply.1} parent=51 // pred_fallthru
                _
              // Predicated region
              $region89: #{dense_residual_apply.1} parent=51 // pred_check
                _
              $region90: #{dense_residual_apply.1} parent=51 // pred_check_branch
                %1443 = sbr.rel target = $region92
              $region91: #{dense_residual_apply.1} parent=51 // pred_region
                _
              $region92: #{dense_residual_apply.1} parent=51 // pred_fallthru
                _
            $region52: #{dense_residual_apply.1} parent=47 // pred_fallthru
              _
            // Predicated region
            $region53: #{dense_residual_apply.1} parent=47 // pred_check
              _
            $region54: #{dense_residual_apply.1} parent=47 // pred_check_branch
              %1248 = sbr.rel target = $region56
            $region55: #{dense_residual_apply.1} parent=47 // pred_region
              %s1250 = sdiv.u32.pop %s1237, 26
              %s1251 = srem.u32.pop %s1237, 26
              // While loop
              $region57: #{dense_residual_apply.1} parent=55 // loop_pre_header
                _
              $region58: #{dense_residual_apply.1} parent=55 // loop_header
                %s1253 = sphi 0, %s1255
                %p1254 = scmp.ge.s32.totalorder %s1253, %s1250
                %s1258 = sphi 0, %s1315
                %s1259 = sphi %s1230, %s1318
                %s1260 = sphi %s1241, %s1319
              $region59: #{dense_residual_apply.1} parent=55 // loop_header_branch
                %1257 = sbr.rel (%p1254) target = $region63
              $region60: #{dense_residual_apply.1} parent=55 // loop_body
                %v1261 = vld [vmem:[%s1259] sm:$0xff]
                %1262 = vst [vmem:[%s1260] sm:$0xff] %v1261
                %v1263 = vld [vmem:[%s1259 + $0x8] sm:$0xff]
                %1264 = vst [vmem:[%s1260 + $0x8] sm:$0xff] %v1263
                %v1265 = vld [vmem:[%s1259 + $0x10] sm:$0xff]
                %1266 = vst [vmem:[%s1260 + $0x10] sm:$0xff] %v1265
                %v1267 = vld [vmem:[%s1259 + $0x18] sm:$0xff]
                %1268 = vst [vmem:[%s1260 + $0x18] sm:$0xff] %v1267
                %v1269 = vld [vmem:[%s1259 + $0x20] sm:$0xff]
                %1270 = vst [vmem:[%s1260 + $0x20] sm:$0xff] %v1269
                %v1271 = vld [vmem:[%s1259 + $0x28] sm:$0xff]
                %1272 = vst [vmem:[%s1260 + $0x28] sm:$0xff] %v1271
                %v1273 = vld [vmem:[%s1259 + $0x30] sm:$0xff]
                %1274 = vst [vmem:[%s1260 + $0x30] sm:$0xff] %v1273
                %v1275 = vld [vmem:[%s1259 + $0x38] sm:$0xff]
                %1276 = vst [vmem:[%s1260 + $0x38] sm:$0xff] %v1275
                %v1277 = vld [vmem:[%s1259 + $0x40] sm:$0xff]
                %1278 = vst [vmem:[%s1260 + $0x40] sm:$0xff] %v1277
                %v1279 = vld [vmem:[%s1259 + $0x48] sm:$0xff]
                %1280 = vst [vmem:[%s1260 + $0x48] sm:$0xff] %v1279
                %v1281 = vld [vmem:[%s1259 + $0x50] sm:$0xff]
                %1282 = vst [vmem:[%s1260 + $0x50] sm:$0xff] %v1281
                %v1283 = vld [vmem:[%s1259 + $0x58] sm:$0xff]
                %1284 = vst [vmem:[%s1260 + $0x58] sm:$0xff] %v1283
                %v1285 = vld [vmem:[%s1259 + $0x60] sm:$0xff]
                %1286 = vst [vmem:[%s1260 + $0x60] sm:$0xff] %v1285
                %v1287 = vld [vmem:[%s1259 + $0x68] sm:$0xff]
                %1288 = vst [vmem:[%s1260 + $0x68] sm:$0xff] %v1287
                %v1289 = vld [vmem:[%s1259 + $0x70] sm:$0xff]
                %1290 = vst [vmem:[%s1260 + $0x70] sm:$0xff] %v1289
                %v1291 = vld [vmem:[%s1259 + $0x78] sm:$0xff]
                %1292 = vst [vmem:[%s1260 + $0x78] sm:$0xff] %v1291
                %v1293 = vld [vmem:[%s1259 + $0x80] sm:$0xff]
                %1294 = vst [vmem:[%s1260 + $0x80] sm:$0xff] %v1293
                %v1295 = vld [vmem:[%s1259 + $0x88] sm:$0xff]
                %1296 = vst [vmem:[%s1260 + $0x88] sm:$0xff] %v1295
                %v1297 = vld [vmem:[%s1259 + $0x90] sm:$0xff]
                %1298 = vst [vmem:[%s1260 + $0x90] sm:$0xff] %v1297
                %v1299 = vld [vmem:[%s1259 + $0x98] sm:$0xff]
                %1300 = vst [vmem:[%s1260 + $0x98] sm:$0xff] %v1299
                %v1301 = vld [vmem:[%s1259 + $0xa0] sm:$0xff]
                %1302 = vst [vmem:[%s1260 + $0xa0] sm:$0xff] %v1301
                %v1303 = vld [vmem:[%s1259 + $0xa8] sm:$0xff]
                %1304 = vst [vmem:[%s1260 + $0xa8] sm:$0xff] %v1303
                %v1305 = vld [vmem:[%s1259 + $0xb0] sm:$0xff]
                %1306 = vst [vmem:[%s1260 + $0xb0] sm:$0xff] %v1305
                %v1307 = vld [vmem:[%s1259 + $0xb8] sm:$0xff]
                %1308 = vst [vmem:[%s1260 + $0xb8] sm:$0xff] %v1307
                %v1309 = vld [vmem:[%s1259 + $0xc0] sm:$0xff]
                %1310 = vst [vmem:[%s1260 + $0xc0] sm:$0xff] %v1309
                %v1311 = vld [vmem:[%s1259 + $0xc8] sm:$0xff]
                %1312 = vst [vmem:[%s1260 + $0xc8] sm:$0xff] %v1311
                %s1313 = sadd.s32 1, %s1258
                %p1314 = scmp.ge.s32.totalorder %s1313, %s1250
                %s1315 = scalar_select %p1314, 0, %s1313
                %s1316 = smul.u32 %s1315, 208
                %s1317 = smul.u32 %s1315, 208
                %s1318 = scalar_lea.vmem %s1230, %s1316 [#allocation2]
                %s1319 = scalar_lea.vmem %s1241, %s1317
              $region61: #{dense_residual_apply.1} parent=55 // loop_footer
                %s1255 = sadd.s32 %s1253, 1
              $region62: #{dense_residual_apply.1} parent=55 // loop_footer_branch
                %1252 = sbr.rel target = $region58
              $region63: #{dense_residual_apply.1} parent=55 // loop_exit
                _
              %s1320 = sdiv.u32.pop %s1237, 26
              %s1321 = srem.u32.pop %s1237, 26
              %s1322 = smul.u32 %s1320, 26
              %s1323 = smul.u32 8, %s1322
              %s1324 = scalar_lea.vmem %s1230, %s1323 [#allocation2]
              %s1325 = smul.u32 8, %s1322
              %s1326 = scalar_lea.vmem %s1241, %s1325
              // While loop
              $region64: #{dense_residual_apply.1} parent=55 // loop_pre_header
                _
              $region65: #{dense_residual_apply.1} parent=55 // loop_header
                %s1328 = sphi 0, %s1330
                %p1329 = scmp.ge.s32.totalorder %s1328, %s1321
                %s1333 = sphi 0, %s1340
                %s1334 = sphi %s1324, %s1343
                %s1335 = sphi %s1326, %s1344
              $region66: #{dense_residual_apply.1} parent=55 // loop_header_branch
                %1332 = sbr.rel (%p1329) target = $region70
              $region67: #{dense_residual_apply.1} parent=55 // loop_body
                %v1336 = vld [vmem:[%s1334] sm:$0xff]
                %1337 = vst [vmem:[%s1335] sm:$0xff] %v1336
                %s1338 = sadd.s32 1, %s1333
                %p1339 = scmp.ge.s32.totalorder %s1338, %s1321
                %s1340 = scalar_select %p1339, 0, %s1338
                %s1341 = smul.u32 %s1340, 8
                %s1342 = smul.u32 %s1340, 8
                %s1343 = scalar_lea.vmem %s1324, %s1341 [#allocation2]
                %s1344 = scalar_lea.vmem %s1326, %s1342
              $region68: #{dense_residual_apply.1} parent=55 // loop_footer
                %s1330 = sadd.s32 %s1328, 1
              $region69: #{dense_residual_apply.1} parent=55 // loop_footer_branch
                %1327 = sbr.rel target = $region65
              $region70: #{dense_residual_apply.1} parent=55 // loop_exit
                _
            $region56: #{dense_residual_apply.1} parent=47 // pred_fallthru
              _
          $region48: #{dense_residual_apply.1} parent=43 // pred_fallthru
            _
          %1444 = vnop
        $region44: #{dense_residual_apply.1} parent=39 // pred_fallthru
          _
      $region40: #{dense_residual_apply.1} parent=5 // pred_fallthru
        _
      %p1445 = scmp.le.s32.totalorder 2, %s11
      // Predicated region
      $region93: #{dense_residual_apply.1} parent=5 // pred_check
        %p1446 = pneg %p1445
      $region94: #{dense_residual_apply.1} parent=5 // pred_check_branch
        %1448 = sbr.rel (%p1446) target = $region96
      $region95: #{dense_residual_apply.1} parent=5 // pred_region
        %s1449 = ssub.s32 %s11, 2
        // Predicated region
        $region97: #{dense_residual_apply.1} parent=95 // pred_check
          %p1450 = pneg %p150
        $region98: #{dense_residual_apply.1} parent=95 // pred_check_branch
          %1452 = sbr.rel (%p1450) target = $region100
        $region99: #{dense_residual_apply.1} parent=95 // pred_region
          %s1453 = sand.u32 %s135, 1
          %s1454 = sand.u32 %s135, 1
          %s1455 = smul.addr %s1454, 208
          %s1456 = scalar_lea.vmem [#allocation2], %s1455
        $region100: #{dense_residual_apply.1} parent=95 // pred_fallthru
          _
      $region96: #{dense_residual_apply.1} parent=5 // pred_fallthru
        _
    $region6: #{dense_residual_apply.1} parent=1 // loop_footer
      %s15 = sadd.s32 1, %s11
    $region7: #{dense_residual_apply.1} parent=1 // loop_footer_branch
      %10 = sbr.rel target = $region3
    $region8: #{dense_residual_apply.1} parent=1 // loop_exit
      _

</llo_original>
